<compile_context>
chip_gen: v5e
topology: v5e:2x2
jax: 0.10.0
libtpu: 0.0.40
codegen_flags: <defaults>
</compile_context>

<pallas_src>
import functools

import numpy as np
import jax
import jax.numpy as jnp
from jax import lax
from jax.experimental import pallas as pl
from jax.experimental.pallas import tpu as pltpu


# ----------------------------------------------------------------------------
# Pallas kernel: dilated 'same' conv (batched im2col matmul) + PPV + head.
# ----------------------------------------------------------------------------
def _rocket_kernel(x_ref, w_ref, nb_ref, lw_ref, lb_ref, sel_ref, out_ref,
                   xp_ref, slab_ref, *, dilations, kernel_length, T, off,
                   max_pad, n_tile, d_pad, k_chunk):
    # x_ref   : (n_tile, D_pad, T)          sample block (conv dtype, D zero-padded)
    # w_ref   : (n_dil, K_pd, KL*D_pad)     im2col conv weights, rows = (tap, chan)
    # nb_ref  : (n_dil, K_pd, 1)            negated conv biases (f32)
    # lw_ref  : (n_out, n_kernels)          head weights scaled by 1/T (f32)
    # lb_ref  : (1, n_out)                  head bias row (f32)
    # sel_ref : (n_tile*T, n_tile)          block-diag ones selector (conv dtype)
    # out_ref : (1, n_tile, n_out)
    # xp_ref  : (n_tile, D_pad, off+T+max_pad)  zero-haloed staging scratch
    # slab_ref: (KL*D_pad, n_tile*T)        im2col slab scratch
    KL = kernel_length
    half = (KL - 1) // 2
    k_pd = w_ref.shape[1]
    n_out = lw_ref.shape[0]

    # --- stage this block into the zero-haloed scratch ------------------------
    # Only the +/- max_pad halo strips are zeroed: the interior is overwritten
    # below, and lanes left of (off - max_pad) are never read by any tap slice.
    if max_pad:
        xp_ref[:, :, off - max_pad:off] = jnp.zeros(
            (n_tile, d_pad, max_pad), xp_ref.dtype)
        xp_ref[:, :, off + T:off + T + max_pad] = jnp.zeros(
            (n_tile, d_pad, max_pad), xp_ref.dtype)
    # `off` is a multiple of 128 -> aligned, unmasked store of the whole block.
    xp_ref[:, :, off:off + T] = x_ref[...]

    chunks = [(lo, min(k_chunk, k_pd - lo)) for lo in range(0, k_pd, k_chunk)]
    outT = jnp.zeros((n_out, n_tile), jnp.float32)       # head accumulator

    for di, dil in enumerate(dilations):                  # static, few dilations
        base = off - half * dil
        # im2col slab for the WHOLE sample block: rows = (tap, chan) at
        # 8-aligned sublane offsets k*D_pad, lanes = (sample, time).
        for k in range(KL):
            src = base + k * dil
            for n in range(n_tile):
                slab_ref[k * d_pad:(k + 1) * d_pad, n * T:(n + 1) * T] = (
                    xp_ref[n, :, src:src + T])
        slab = slab_ref[...]

        for lo, kc in chunks:                              # bounded f32 intermediates
            # One wide MXU matmul: (kc, KL*D_pad) x (KL*D_pad, n_tile*T), f32 acc.
            acc = jnp.dot(w_ref[di, lo:lo + kc, :], slab,
                          preferred_element_type=jnp.float32)
            # PPV with the conv bias folded into the threshold: acc + b > 0.
            pos = (acc > nb_ref[di, lo:lo + kc, :]).astype(slab.dtype)
            # Per-sample positive counts via the block-diagonal ones selector
            # (exact: 0/1 operands, f32 accumulation; keeps the reduce on MXU).
            counts = jnp.dot(pos, sel_ref[...],
                             preferred_element_type=jnp.float32)   # (kc, n_tile)
            # Head contribution; 1/T already folded into lw in the wrapper.
            col = di * k_pd + lo
            outT = outT + jnp.dot(lw_ref[:, col:col + kc], counts,
                                  preferred_element_type=jnp.float32)

    out_ref[0] = (outT.T + lb_ref[...]).astype(out_ref.dtype)


# ----------------------------------------------------------------------------
# Wrapper: layout plumbing (D padding, im2col weight reshape, bias negation,
# 1/T folding, N padding), grid/BlockSpecs, VMEM budgeting, pallas_call.
# ----------------------------------------------------------------------------
@functools.partial(jax.jit, static_argnames=("dilations", "kernel_length",
                                             "conv_dtype", "n_tile", "k_chunk"))
def rocket_forward(x, conv_w, conv_b, lin_w, lin_b, *, dilations,
                   kernel_length=9, conv_dtype=jnp.bfloat16, n_tile=None,
                   k_chunk=None):
    N, D, T = x.shape
    KL = kernel_length
    assert KL % 2 == 1, "padding='same' centering implemented for odd kernels only"
    n_dil = len(dilations)
    total_kernels = conv_w.shape[0]
    assert total_kernels % n_dil == 0
    k_pd = total_kernels // n_dil
    n_out = lin_w.shape[0]
    half = (KL - 1) // 2
    max_pad = half * max(dilations)

    d_pad = ((D + 7) // 8) * 8                              # sublane-aligned channels
    off = ((max_pad + 127) // 128) * 128 if max_pad else 0  # 128-aligned interior
    t_tot = off + T + max_pad

    # Sample-block tiling: cap at 8, but keep >= 2 grid steps whenever N >= 2
    # so both v7x TensorCores get work on the "parallel" axis.
    if n_tile is None:
        n_tile = min(8, max(1, N // 2)) if N >= 2 else 1
    n_extra = (-N) % n_tile
    N_pad = N + n_extra
    num_blocks = N_pad // n_tile

    # K_pd chunking bounds the f32 (kc, n_tile*T) conv activations in VMEM.
    if k_chunk is None:
        k_chunk = min(k_pd, 512)
    k_chunk = max(1, min(k_chunk, k_pd))

    # ---- wrapper-side layout plumbing (free) ----
    x_in = jnp.pad(x.astype(conv_dtype), ((0, n_extra), (0, d_pad - D), (0, 0)))
    # conv_w (n_dil*K_pd, D, KL) -> (n_dil, K_pd, KL*D_pad); row order (tap, chan)
    w = jnp.pad(conv_w.astype(conv_dtype), ((0, 0), (0, d_pad - D), (0, 0)))
    w_im2col = (w.reshape(n_dil, k_pd, d_pad, KL)
                 .transpose(0, 1, 3, 2)
                 .reshape(n_dil, k_pd, KL * d_pad))
    neg_b = (-conv_b.astype(jnp.float32)).reshape(n_dil, k_pd, 1)
    lw_scaled = lin_w.astype(jnp.float32) / float(T)        # 1/T folded into head
    lb_row = lin_b.astype(jnp.float32).reshape(1, n_out)
    # Block-diagonal ones selector: sel[n*T + t, n] = 1 (per-sample count matmul).
    sel = (jnp.arange(n_tile * T)[:, None] // T
           == jnp.arange(n_tile)[None, :]).astype(conv_dtype)

    kernel = functools.partial(
        _rocket_kernel,
        dilations=tuple(int(d) for d in dilations),
        kernel_length=KL, T=T, off=off, max_pad=max_pad,
        n_tile=n_tile, d_pad=d_pad, k_chunk=k_chunk)

    # Honest VMEM budget: pipelined operands (double-buffered), scratches, and
    # the f32 intermediates; capped below every generation's physical VMEM.
    bpe = jnp.dtype(conv_dtype).itemsize
    need = (2 * n_tile * d_pad * T * bpe                     # x block (2 bufs)
            + n_tile * d_pad * t_tot * bpe                   # xp scratch
            + KL * d_pad * n_tile * T * bpe                  # slab scratch
            + 2 * (n_dil * k_pd * KL * d_pad * bpe           # conv weights
                   + n_dil * k_pd * 4                        # neg biases
                   + n_out * total_kernels * 4 + n_out * 4   # head weights/bias
                   + n_tile * T * n_tile * bpe)              # selector
            + k_chunk * n_tile * T * (4 + bpe)               # acc (f32) + pos
            + (k_chunk + n_out) * n_tile * 4                 # counts + outT
            + 2 * n_tile * n_out * 4)                        # out block (2 bufs)
    vmem_limit = int(min(max(2 * need, 16 * 2 ** 20), 48 * 2 ** 20))

    flops = (2 * N_pad * total_kernels * KL * d_pad * T      # conv matmuls
             + 2 * N_pad * total_kernels * T                 # selector count matmul
             + 2 * N_pad * total_kernels * n_out)            # head
    bytes_accessed = (N_pad * d_pad * T * bpe + total_kernels * KL * d_pad * bpe
                      + total_kernels * (n_out + 1) * 4 + N_pad * n_out * 4)

    grid_spec = pltpu.PrefetchScalarGridSpec(
        num_scalar_prefetch=0,
        grid=(num_blocks,),
        in_specs=[
            pl.BlockSpec((n_tile, d_pad, T), lambda i: (i, 0, 0)),
            pl.BlockSpec((n_dil, k_pd, KL * d_pad), lambda i: (0, 0, 0)),
            pl.BlockSpec((n_dil, k_pd, 1), lambda i: (0, 0, 0)),
            pl.BlockSpec((n_out, total_kernels), lambda i: (0, 0)),
            pl.BlockSpec((1, n_out), lambda i: (0, 0)),
            pl.BlockSpec((n_tile * T, n_tile), lambda i: (0, 0)),
        ],
        # 3-D output block so the last two dims equal the full array dims
        # (keeps the (8,128) BlockSpec rule satisfied for any n_tile / n_out).
        out_specs=pl.BlockSpec((1, n_tile, n_out), lambda i: (i, 0, 0)),
        scratch_shapes=[
            pltpu.VMEM((n_tile, d_pad, t_tot), conv_dtype),    # zero-haloed x
            pltpu.VMEM((KL * d_pad, n_tile * T), conv_dtype),  # im2col slab
        ],
    )

    out = pl.pallas_call(
        kernel,
        out_shape=jax.ShapeDtypeStruct((num_blocks, n_tile, n_out), jnp.float32),
        grid_spec=grid_spec,
        compiler_params=pltpu.CompilerParams(
            dimension_semantics=("parallel",),
            vmem_limit_bytes=vmem_limit),
        cost_estimate=pl.CostEstimate(flops=flops, transcendentals=0,
                                      bytes_accessed=bytes_accessed),
    )(x_in, w_im2col, neg_b, lw_scaled, lb_row, sel)
    return out.reshape(N_pad, n_out)[:N]                       # (N, n_out)


# ----------------------------------------------------------------------------
# Deterministic parameter construction (mirrors Rocket.__init__ shapes).
# total_kernels = (n_kernels // 2**max_exponent * 2) * n_dilations, exactly as
# in the PyTorch RocketFeatures constructor.
# ----------------------------------------------------------------------------
def make_rocket_params(key, D, T, n_kernels, n_out, kernel_length=9):
    max_exponent = int(np.floor(np.log2((T - 1) / (kernel_length - 1))))
    dilations = tuple(int(d) for d in 2 ** np.arange(max_exponent + 1))
    k_per_dil = n_kernels // dilations[-1] * 2
    total_kernels = k_per_dil * len(dilations)

    kcw, kcb, klw, klb = jax.random.split(key, 4)
    bound_c = 1.0 / np.sqrt(D * kernel_length)
    conv_w = jax.random.uniform(kcw, (total_kernels, D, kernel_length),
                                jnp.float32, -bound_c, bound_c)
    conv_b = jax.random.uniform(kcb, (total_kernels,), jnp.float32,
                                -bound_c, bound_c)
    bound_l = 1.0 / np.sqrt(total_kernels)
    lin_w = jax.random.uniform(klw, (n_out, total_kernels), jnp.float32,
                               -bound_l, bound_l)
    lin_b = jax.random.uniform(klb, (n_out,), jnp.float32, -bound_l, bound_l)
    return conv_w, conv_b, lin_w, lin_b, dilations


# ----------------------------------------------------------------------------
# Pure-JAX reference (lax dilated conv, highest precision) for correctness.
# ----------------------------------------------------------------------------
def rocket_reference(x, conv_w, conv_b, lin_w, lin_b, dilations,
                     kernel_length=9):
    n_kernels = conv_w.shape[0]
    k_per_dil = n_kernels // len(dilations)
    feats = []
    for di, dil in enumerate(dilations):
        lo, hi = di * k_per_dil, (di + 1) * k_per_dil
        pad = (kernel_length - 1) // 2 * dil
        y = lax.conv_general_dilated(
            x, conv_w[lo:hi], window_strides=(1,), padding=[(pad, pad)],
            rhs_dilation=(dil,), dimension_numbers=("NCH", "OIH", "NCH"),
            precision=lax.Precision.HIGHEST)
        y = y + conv_b[lo:hi][None, :, None]
        feats.append(jnp.mean((y > 0).astype(jnp.float32), axis=-1))
    features = jnp.concatenate(feats, axis=1)
    return jnp.dot(features, lin_w.T,
                   precision=lax.Precision.HIGHEST) + lin_b[None, :]


# TODO(synk): init_biases (quantile-based bias fitting) and fit_ridge_LOOCV are
# training-time utilities, not part of forward(); not implemented as kernels.

if __name__ == "__main__":
    N, D, T = 2, 4, 64
    n_kernels, n_out, kernel_length = 16, 8, 9

    key = jax.random.PRNGKey(0)
    kx, kp = jax.random.split(key)
    x = jax.random.normal(kx, (N, D, T), jnp.float32)

    conv_w, conv_b, lin_w, lin_b, dilations = make_rocket_params(
        kp, D, T, n_kernels, n_out, kernel_length)

    ref = rocket_reference(x, conv_w, conv_b, lin_w, lin_b, dilations,
                           kernel_length)

    # f32 conv path: tight-ish check (PPV sign flips of near-zero activations
    # bound the achievable tolerance of a sign-thresholding feature map).
    out_f32 = jax.block_until_ready(rocket_forward(
        x, conv_w, conv_b, lin_w, lin_b, dilations=dilations,
        kernel_length=kernel_length, conv_dtype=jnp.float32))
    np.testing.assert_allclose(np.asarray(out_f32), np.asarray(ref),
                               rtol=0.0, atol=1.5e-2)

    # Default bf16 conv path (f32 accumulation; PPV counts + head exact in f32).
    out_bf16 = jax.block_until_ready(rocket_forward(
        x, conv_w, conv_b, lin_w, lin_b, dilations=dilations,
        kernel_length=kernel_length))
    np.testing.assert_allclose(np.asarray(out_bf16), np.asarray(ref),
                               rtol=0.0, atol=4e-2)

    assert out_bf16.shape == (N, n_out)
    print("KERNEL_OK")
</pallas_src>

<mosaic_0001>
module attributes {stable_mosaic.version = 11 : i64} {
  func.func @_rocket_kernel(%arg0: i32, %arg1: memref<1x8x64xf32, #tpu.memory_space<vmem>>, %arg2: memref<3x8x72xf32, #tpu.memory_space<vmem>>, %arg3: memref<3x8x1xf32, #tpu.memory_space<vmem>>, %arg4: memref<8x24xf32, #tpu.memory_space<vmem>>, %arg5: memref<1x8xf32, #tpu.memory_space<vmem>>, %arg6: memref<64x1xf32, #tpu.memory_space<vmem>>, %arg7: memref<1x1x8xf32, #tpu.memory_space<vmem>>, %arg8: memref<1x8x208xf32, #tpu.memory_space<vmem>>, %arg9: memref<72x64xf32, #tpu.memory_space<vmem>>) attributes {dimension_semantics = [#tpu.dimension_semantics<parallel>], iteration_bounds = array<i64: 2>, scalar_prefetch = 0 : i64, scratch_operands = 2 : i64, tpu.core_type = #tpu.core_type<tc>, window_params = [{transform_indices = @transform_0, window_bounds = array<i64: 1, 8, 64>}, {pipeline_mode = #tpu.pipeline_mode<synchronous>, transform_indices = @transform_1, window_bounds = array<i64: 3, 8, 72>}, {pipeline_mode = #tpu.pipeline_mode<synchronous>, transform_indices = @transform_2, window_bounds = array<i64: 3, 8, 1>}, {pipeline_mode = #tpu.pipeline_mode<synchronous>, transform_indices = @transform_3, window_bounds = array<i64: 8, 24>}, {pipeline_mode = #tpu.pipeline_mode<synchronous>, transform_indices = @transform_4, window_bounds = array<i64: 1, 8>}, {pipeline_mode = #tpu.pipeline_mode<synchronous>, transform_indices = @transform_5, window_bounds = array<i64: 64, 1>}, {transform_indices = @transform_6, window_bounds = array<i64: 1, 1, 8>}]} {
    %cst = arith.constant 0.000000e+00 : f32
    %0 = vector.broadcast %cst : f32 to vector<1x8x16xf32>
    %c0 = arith.constant 0 : index
    %c0_0 = arith.constant 0 : index
    %c112 = arith.constant 112 : index
    %1 = vector.load %arg8[%c0, %c0_0, %c112] : memref<1x8x208xf32, #tpu.memory_space<vmem>>, vector<1x8x16xf32>
    tpu.vector_store %arg8[%c0, %c0_0, %c112], %0 {strides = array<i32>} : memref<1x8x208xf32, #tpu.memory_space<vmem>>, vector<1x8x16xf32>,
    %cst_1 = arith.constant 0.000000e+00 : f32
    %2 = vector.broadcast %cst_1 : f32 to vector<1x8x16xf32>
    %c0_2 = arith.constant 0 : index
    %c0_3 = arith.constant 0 : index
    %c192 = arith.constant 192 : index
    %3 = vector.load %arg8[%c0_2, %c0_3, %c192] : memref<1x8x208xf32, #tpu.memory_space<vmem>>, vector<1x8x16xf32>
    tpu.vector_store %arg8[%c0_2, %c0_3, %c192], %2 {strides = array<i32>} : memref<1x8x208xf32, #tpu.memory_space<vmem>>, vector<1x8x16xf32>,
    %c0_4 = arith.constant 0 : index
    %c0_5 = arith.constant 0 : index
    %c0_6 = arith.constant 0 : index
    %4 = vector.load %arg1[%c0_4, %c0_5, %c0_6] : memref<1x8x64xf32, #tpu.memory_space<vmem>>, vector<1x8x64xf32>
    %c0_7 = arith.constant 0 : index
    %c0_8 = arith.constant 0 : index
    %c128 = arith.constant 128 : index
    %5 = vector.load %arg8[%c0_7, %c0_8, %c128] : memref<1x8x208xf32, #tpu.memory_space<vmem>>, vector<1x8x64xf32>
    tpu.vector_store %arg8[%c0_7, %c0_8, %c128], %4 {strides = array<i32>} : memref<1x8x208xf32, #tpu.memory_space<vmem>>, vector<1x8x64xf32>,
    %cst_9 = arith.constant 0.000000e+00 : f32
    %6 = vector.broadcast %cst_9 : f32 to vector<8x1xf32>
    %c0_10 = arith.constant 0 : index
    %c0_11 = arith.constant 0 : index
    %c124 = arith.constant 124 : index
    %7 = vector.load %arg8[%c0_10, %c0_11, %c124] : memref<1x8x208xf32, #tpu.memory_space<vmem>>, vector<1x8x64xf32>
    %8 = vector.shape_cast %7 : vector<1x8x64xf32> to vector<8x64xf32>
    %c0_12 = arith.constant 0 : index
    %c0_13 = arith.constant 0 : index
    %9 = vector.load %arg9[%c0_12, %c0_13] : memref<72x64xf32, #tpu.memory_space<vmem>>, vector<8x64xf32>
    tpu.vector_store %arg9[%c0_12, %c0_13], %8 {strides = array<i32>} : memref<72x64xf32, #tpu.memory_space<vmem>>, vector<8x64xf32>,
    %c0_14 = arith.constant 0 : index
    %c0_15 = arith.constant 0 : index
    %c125 = arith.constant 125 : index
    %10 = vector.load %arg8[%c0_14, %c0_15, %c125] : memref<1x8x208xf32, #tpu.memory_space<vmem>>, vector<1x8x64xf32>
    %11 = vector.shape_cast %10 : vector<1x8x64xf32> to vector<8x64xf32>
    %c8 = arith.constant 8 : index
    %c0_16 = arith.constant 0 : index
    %12 = vector.load %arg9[%c8, %c0_16] : memref<72x64xf32, #tpu.memory_space<vmem>>, vector<8x64xf32>
    tpu.vector_store %arg9[%c8, %c0_16], %11 {strides = array<i32>} : memref<72x64xf32, #tpu.memory_space<vmem>>, vector<8x64xf32>,
    %c0_17 = arith.constant 0 : index
    %c0_18 = arith.constant 0 : index
    %c126 = arith.constant 126 : index
    %13 = vector.load %arg8[%c0_17, %c0_18, %c126] : memref<1x8x208xf32, #tpu.memory_space<vmem>>, vector<1x8x64xf32>
    %14 = vector.shape_cast %13 : vector<1x8x64xf32> to vector<8x64xf32>
    %c16 = arith.constant 16 : index
    %c0_19 = arith.constant 0 : index
    %15 = vector.load %arg9[%c16, %c0_19] : memref<72x64xf32, #tpu.memory_space<vmem>>, vector<8x64xf32>
    tpu.vector_store %arg9[%c16, %c0_19], %14 {strides = array<i32>} : memref<72x64xf32, #tpu.memory_space<vmem>>, vector<8x64xf32>,
    %c0_20 = arith.constant 0 : index
    %c0_21 = arith.constant 0 : index
    %c127 = arith.constant 127 : index
    %16 = vector.load %arg8[%c0_20, %c0_21, %c127] : memref<1x8x208xf32, #tpu.memory_space<vmem>>, vector<1x8x64xf32>
    %17 = vector.shape_cast %16 : vector<1x8x64xf32> to vector<8x64xf32>
    %c24 = arith.constant 24 : index
    %c0_22 = arith.constant 0 : index
    %18 = vector.load %arg9[%c24, %c0_22] : memref<72x64xf32, #tpu.memory_space<vmem>>, vector<8x64xf32>
    tpu.vector_store %arg9[%c24, %c0_22], %17 {strides = array<i32>} : memref<72x64xf32, #tpu.memory_space<vmem>>, vector<8x64xf32>,
    %c0_23 = arith.constant 0 : index
    %c0_24 = arith.constant 0 : index
    %c128_25 = arith.constant 128 : index
    %19 = vector.load %arg8[%c0_23, %c0_24, %c128_25] : memref<1x8x208xf32, #tpu.memory_space<vmem>>, vector<1x8x64xf32>
    %20 = vector.shape_cast %19 : vector<1x8x64xf32> to vector<8x64xf32>
    %c32 = arith.constant 32 : index
    %c0_26 = arith.constant 0 : index
    %21 = vector.load %arg9[%c32, %c0_26] : memref<72x64xf32, #tpu.memory_space<vmem>>, vector<8x64xf32>
    tpu.vector_store %arg9[%c32, %c0_26], %20 {strides = array<i32>} : memref<72x64xf32, #tpu.memory_space<vmem>>, vector<8x64xf32>,
    %c0_27 = arith.constant 0 : index
    %c0_28 = arith.constant 0 : index
    %c129 = arith.constant 129 : index
    %22 = vector.load %arg8[%c0_27, %c0_28, %c129] : memref<1x8x208xf32, #tpu.memory_space<vmem>>, vector<1x8x64xf32>
    %23 = vector.shape_cast %22 : vector<1x8x64xf32> to vector<8x64xf32>
    %c40 = arith.constant 40 : index
    %c0_29 = arith.constant 0 : index
    %24 = vector.load %arg9[%c40, %c0_29] : memref<72x64xf32, #tpu.memory_space<vmem>>, vector<8x64xf32>
    tpu.vector_store %arg9[%c40, %c0_29], %23 {strides = array<i32>} : memref<72x64xf32, #tpu.memory_space<vmem>>, vector<8x64xf32>,
    %c0_30 = arith.constant 0 : index
    %c0_31 = arith.constant 0 : index
    %c130 = arith.constant 130 : index
    %25 = vector.load %arg8[%c0_30, %c0_31, %c130] : memref<1x8x208xf32, #tpu.memory_space<vmem>>, vector<1x8x64xf32>
    %26 = vector.shape_cast %25 : vector<1x8x64xf32> to vector<8x64xf32>
    %c48 = arith.constant 48 : index
    %c0_32 = arith.constant 0 : index
    %27 = vector.load %arg9[%c48, %c0_32] : memref<72x64xf32, #tpu.memory_space<vmem>>, vector<8x64xf32>
    tpu.vector_store %arg9[%c48, %c0_32], %26 {strides = array<i32>} : memref<72x64xf32, #tpu.memory_space<vmem>>, vector<8x64xf32>,
    %c0_33 = arith.constant 0 : index
    %c0_34 = arith.constant 0 : index
    %c131 = arith.constant 131 : index
    %28 = vector.load %arg8[%c0_33, %c0_34, %c131] : memref<1x8x208xf32, #tpu.memory_space<vmem>>, vector<1x8x64xf32>
    %29 = vector.shape_cast %28 : vector<1x8x64xf32> to vector<8x64xf32>
    %c56 = arith.constant 56 : index
    %c0_35 = arith.constant 0 : index
    %30 = vector.load %arg9[%c56, %c0_35] : memref<72x64xf32, #tpu.memory_space<vmem>>, vector<8x64xf32>
    tpu.vector_store %arg9[%c56, %c0_35], %29 {strides = array<i32>} : memref<72x64xf32, #tpu.memory_space<vmem>>, vector<8x64xf32>,
    %c0_36 = arith.constant 0 : index
    %c0_37 = arith.constant 0 : index
    %c132 = arith.constant 132 : index
    %31 = vector.load %arg8[%c0_36, %c0_37, %c132] : memref<1x8x208xf32, #tpu.memory_space<vmem>>, vector<1x8x64xf32>
    %32 = vector.shape_cast %31 : vector<1x8x64xf32> to vector<8x64xf32>
    %c64 = arith.constant 64 : index
    %c0_38 = arith.constant 0 : index
    %33 = vector.load %arg9[%c64, %c0_38] : memref<72x64xf32, #tpu.memory_space<vmem>>, vector<8x64xf32>
    tpu.vector_store %arg9[%c64, %c0_38], %32 {strides = array<i32>} : memref<72x64xf32, #tpu.memory_space<vmem>>, vector<8x64xf32>,
    %c0_39 = arith.constant 0 : index
    %c0_40 = arith.constant 0 : index
    %34 = vector.load %arg9[%c0_39, %c0_40] : memref<72x64xf32, #tpu.memory_space<vmem>>, vector<72x64xf32>
    %c0_41 = arith.constant 0 : index
    %c0_42 = arith.constant 0 : index
    %c0_43 = arith.constant 0 : index
    %35 = vector.load %arg2[%c0_41, %c0_42, %c0_43] : memref<3x8x72xf32, #tpu.memory_space<vmem>>, vector<1x8x72xf32>
    %36 = vector.shape_cast %35 : vector<1x8x72xf32> to vector<8x72xf32>
    %cst_44 = arith.constant dense<0.000000e+00> : vector<8x64xf32>
    %37 = tpu.matmul %36, %34, %cst_44 {dimension_numbers = #tpu.dot_dimension_numbers<[1], [0], [0], [1], [0, 0, 1, 1], [], []>} : vector<8x72xf32>, vector<72x64xf32>, vector<8x64xf32> -> vector<8x64xf32>
    %c0_45 = arith.constant 0 : index
    %c0_46 = arith.constant 0 : index
    %c0_47 = arith.constant 0 : index
    %38 = vector.load %arg3[%c0_45, %c0_46, %c0_47] : memref<3x8x1xf32, #tpu.memory_space<vmem>>, vector<1x8x1xf32>
    %39 = vector.shape_cast %38 : vector<1x8x1xf32> to vector<8x1xf32>
    %40 = vector.broadcast %39 : vector<8x1xf32> to vector<8x64xf32>
    %41 = arith.cmpf ogt, %37, %40 : vector<8x64xf32>
    %42 = arith.extui %41 : vector<8x64xi1> to vector<8x64xi32>
    %43 = arith.sitofp %42 : vector<8x64xi32> to vector<8x64xf32>
    %c0_48 = arith.constant 0 : index
    %c0_49 = arith.constant 0 : index
    %44 = vector.load %arg6[%c0_48, %c0_49] : memref<64x1xf32, #tpu.memory_space<vmem>>, vector<64x1xf32>
    %cst_50 = arith.constant dense<0.000000e+00> : vector<8x1xf32>
    %45 = tpu.matmul %43, %44, %cst_50 {dimension_numbers = #tpu.dot_dimension_numbers<[1], [0], [0], [1], [0, 0, 1, 1], [], []>} : vector<8x64xf32>, vector<64x1xf32>, vector<8x1xf32> -> vector<8x1xf32>
    %c0_51 = arith.constant 0 : index
    %c0_52 = arith.constant 0 : index
    %46 = vector.load %arg4[%c0_51, %c0_52] : memref<8x24xf32, #tpu.memory_space<vmem>>, vector<8x8xf32>
    %cst_53 = arith.constant dense<0.000000e+00> : vector<8x1xf32>
    %47 = tpu.matmul %46, %45, %cst_53 {dimension_numbers = #tpu.dot_dimension_numbers<[1], [0], [0], [1], [0, 0, 1, 1], [], []>} : vector<8x8xf32>, vector<8x1xf32>, vector<8x1xf32> -> vector<8x1xf32>
    %48 = arith.addf %6, %47 : vector<8x1xf32>
    %c0_54 = arith.constant 0 : index
    %c0_55 = arith.constant 0 : index
    %c120 = arith.constant 120 : index
    %49 = vector.load %arg8[%c0_54, %c0_55, %c120] : memref<1x8x208xf32, #tpu.memory_space<vmem>>, vector<1x8x64xf32>
    %50 = vector.shape_cast %49 : vector<1x8x64xf32> to vector<8x64xf32>
    %c0_56 = arith.constant 0 : index
    %c0_57 = arith.constant 0 : index
    %51 = vector.load %arg9[%c0_56, %c0_57] : memref<72x64xf32, #tpu.memory_space<vmem>>, vector<8x64xf32>
    tpu.vector_store %arg9[%c0_56, %c0_57], %50 {strides = array<i32>} : memref<72x64xf32, #tpu.memory_space<vmem>>, vector<8x64xf32>,
    %c0_58 = arith.constant 0 : index
    %c0_59 = arith.constant 0 : index
    %c122 = arith.constant 122 : index
    %52 = vector.load %arg8[%c0_58, %c0_59, %c122] : memref<1x8x208xf32, #tpu.memory_space<vmem>>, vector<1x8x64xf32>
    %53 = vector.shape_cast %52 : vector<1x8x64xf32> to vector<8x64xf32>
    %c8_60 = arith.constant 8 : index
    %c0_61 = arith.constant 0 : index
    %54 = vector.load %arg9[%c8_60, %c0_61] : memref<72x64xf32, #tpu.memory_space<vmem>>, vector<8x64xf32>
    tpu.vector_store %arg9[%c8_60, %c0_61], %53 {strides = array<i32>} : memref<72x64xf32, #tpu.memory_space<vmem>>, vector<8x64xf32>,
    %c0_62 = arith.constant 0 : index
    %c0_63 = arith.constant 0 : index
    %c124_64 = arith.constant 124 : index
    %55 = vector.load %arg8[%c0_62, %c0_63, %c124_64] : memref<1x8x208xf32, #tpu.memory_space<vmem>>, vector<1x8x64xf32>
    %56 = vector.shape_cast %55 : vector<1x8x64xf32> to vector<8x64xf32>
    %c16_65 = arith.constant 16 : index
    %c0_66 = arith.constant 0 : index
    %57 = vector.load %arg9[%c16_65, %c0_66] : memref<72x64xf32, #tpu.memory_space<vmem>>, vector<8x64xf32>
    tpu.vector_store %arg9[%c16_65, %c0_66], %56 {strides = array<i32>} : memref<72x64xf32, #tpu.memory_space<vmem>>, vector<8x64xf32>,
    %c0_67 = arith.constant 0 : index
    %c0_68 = arith.constant 0 : index
    %c126_69 = arith.constant 126 : index
    %58 = vector.load %arg8[%c0_67, %c0_68, %c126_69] : memref<1x8x208xf32, #tpu.memory_space<vmem>>, vector<1x8x64xf32>
    %59 = vector.shape_cast %58 : vector<1x8x64xf32> to vector<8x64xf32>
    %c24_70 = arith.constant 24 : index
    %c0_71 = arith.constant 0 : index
    %60 = vector.load %arg9[%c24_70, %c0_71] : memref<72x64xf32, #tpu.memory_space<vmem>>, vector<8x64xf32>
    tpu.vector_store %arg9[%c24_70, %c0_71], %59 {strides = array<i32>} : memref<72x64xf32, #tpu.memory_space<vmem>>, vector<8x64xf32>,
    %c0_72 = arith.constant 0 : index
    %c0_73 = arith.constant 0 : index
    %c128_74 = arith.constant 128 : index
    %61 = vector.load %arg8[%c0_72, %c0_73, %c128_74] : memref<1x8x208xf32, #tpu.memory_space<vmem>>, vector<1x8x64xf32>
    %62 = vector.shape_cast %61 : vector<1x8x64xf32> to vector<8x64xf32>
    %c32_75 = arith.constant 32 : index
    %c0_76 = arith.constant 0 : index
    %63 = vector.load %arg9[%c32_75, %c0_76] : memref<72x64xf32, #tpu.memory_space<vmem>>, vector<8x64xf32>
    tpu.vector_store %arg9[%c32_75, %c0_76], %62 {strides = array<i32>} : memref<72x64xf32, #tpu.memory_space<vmem>>, vector<8x64xf32>,
    %c0_77 = arith.constant 0 : index
    %c0_78 = arith.constant 0 : index
    %c130_79 = arith.constant 130 : index
    %64 = vector.load %arg8[%c0_77, %c0_78, %c130_79] : memref<1x8x208xf32, #tpu.memory_space<vmem>>, vector<1x8x64xf32>
    %65 = vector.shape_cast %64 : vector<1x8x64xf32> to vector<8x64xf32>
    %c40_80 = arith.constant 40 : index
    %c0_81 = arith.constant 0 : index
    %66 = vector.load %arg9[%c40_80, %c0_81] : memref<72x64xf32, #tpu.memory_space<vmem>>, vector<8x64xf32>
    tpu.vector_store %arg9[%c40_80, %c0_81], %65 {strides = array<i32>} : memref<72x64xf32, #tpu.memory_space<vmem>>, vector<8x64xf32>,
    %c0_82 = arith.constant 0 : index
    %c0_83 = arith.constant 0 : index
    %c132_84 = arith.constant 132 : index
    %67 = vector.load %arg8[%c0_82, %c0_83, %c132_84] : memref<1x8x208xf32, #tpu.memory_space<vmem>>, vector<1x8x64xf32>
    %68 = vector.shape_cast %67 : vector<1x8x64xf32> to vector<8x64xf32>
    %c48_85 = arith.constant 48 : index
    %c0_86 = arith.constant 0 : index
    %69 = vector.load %arg9[%c48_85, %c0_86] : memref<72x64xf32, #tpu.memory_space<vmem>>, vector<8x64xf32>
    tpu.vector_store %arg9[%c48_85, %c0_86], %68 {strides = array<i32>} : memref<72x64xf32, #tpu.memory_space<vmem>>, vector<8x64xf32>,
    %c0_87 = arith.constant 0 : index
    %c0_88 = arith.constant 0 : index
    %c134 = arith.constant 134 : index
    %70 = vector.load %arg8[%c0_87, %c0_88, %c134] : memref<1x8x208xf32, #tpu.memory_space<vmem>>, vector<1x8x64xf32>
    %71 = vector.shape_cast %70 : vector<1x8x64xf32> to vector<8x64xf32>
    %c56_89 = arith.constant 56 : index
    %c0_90 = arith.constant 0 : index
    %72 = vector.load %arg9[%c56_89, %c0_90] : memref<72x64xf32, #tpu.memory_space<vmem>>, vector<8x64xf32>
    tpu.vector_store %arg9[%c56_89, %c0_90], %71 {strides = array<i32>} : memref<72x64xf32, #tpu.memory_space<vmem>>, vector<8x64xf32>,
    %c0_91 = arith.constant 0 : index
    %c0_92 = arith.constant 0 : index
    %c136 = arith.constant 136 : index
    %73 = vector.load %arg8[%c0_91, %c0_92, %c136] : memref<1x8x208xf32, #tpu.memory_space<vmem>>, vector<1x8x64xf32>
    %74 = vector.shape_cast %73 : vector<1x8x64xf32> to vector<8x64xf32>
    %c64_93 = arith.constant 64 : index
    %c0_94 = arith.constant 0 : index
    %75 = vector.load %arg9[%c64_93, %c0_94] : memref<72x64xf32, #tpu.memory_space<vmem>>, vector<8x64xf32>
    tpu.vector_store %arg9[%c64_93, %c0_94], %74 {strides = array<i32>} : memref<72x64xf32, #tpu.memory_space<vmem>>, vector<8x64xf32>,
    %c0_95 = arith.constant 0 : index
    %c0_96 = arith.constant 0 : index
    %76 = vector.load %arg9[%c0_95, %c0_96] : memref<72x64xf32, #tpu.memory_space<vmem>>, vector<72x64xf32>
    %c1 = arith.constant 1 : index
    %c0_97 = arith.constant 0 : index
    %c0_98 = arith.constant 0 : index
    %77 = vector.load %arg2[%c1, %c0_97, %c0_98] : memref<3x8x72xf32, #tpu.memory_space<vmem>>, vector<1x8x72xf32>
    %78 = vector.shape_cast %77 : vector<1x8x72xf32> to vector<8x72xf32>
    %cst_99 = arith.constant dense<0.000000e+00> : vector<8x64xf32>
    %79 = tpu.matmul %78, %76, %cst_99 {dimension_numbers = #tpu.dot_dimension_numbers<[1], [0], [0], [1], [0, 0, 1, 1], [], []>} : vector<8x72xf32>, vector<72x64xf32>, vector<8x64xf32> -> vector<8x64xf32>
    %c1_100 = arith.constant 1 : index
    %c0_101 = arith.constant 0 : index
    %c0_102 = arith.constant 0 : index
    %80 = vector.load %arg3[%c1_100, %c0_101, %c0_102] : memref<3x8x1xf32, #tpu.memory_space<vmem>>, vector<1x8x1xf32>
    %81 = vector.shape_cast %80 : vector<1x8x1xf32> to vector<8x1xf32>
    %82 = vector.broadcast %81 : vector<8x1xf32> to vector<8x64xf32>
    %83 = arith.cmpf ogt, %79, %82 : vector<8x64xf32>
    %84 = arith.extui %83 : vector<8x64xi1> to vector<8x64xi32>
    %85 = arith.sitofp %84 : vector<8x64xi32> to vector<8x64xf32>
    %c0_103 = arith.constant 0 : index
    %c0_104 = arith.constant 0 : index
    %86 = vector.load %arg6[%c0_103, %c0_104] : memref<64x1xf32, #tpu.memory_space<vmem>>, vector<64x1xf32>
    %cst_105 = arith.constant dense<0.000000e+00> : vector<8x1xf32>
    %87 = tpu.matmul %85, %86, %cst_105 {dimension_numbers = #tpu.dot_dimension_numbers<[1], [0], [0], [1], [0, 0, 1, 1], [], []>} : vector<8x64xf32>, vector<64x1xf32>, vector<8x1xf32> -> vector<8x1xf32>
    %c0_106 = arith.constant 0 : index
    %c8_107 = arith.constant 8 : index
    %88 = vector.load %arg4[%c0_106, %c8_107] : memref<8x24xf32, #tpu.memory_space<vmem>>, vector<8x8xf32>
    %cst_108 = arith.constant dense<0.000000e+00> : vector<8x1xf32>
    %89 = tpu.matmul %88, %87, %cst_108 {dimension_numbers = #tpu.dot_dimension_numbers<[1], [0], [0], [1], [0, 0, 1, 1], [], []>} : vector<8x8xf32>, vector<8x1xf32>, vector<8x1xf32> -> vector<8x1xf32>
    %90 = arith.addf %48, %89 : vector<8x1xf32>
    %c0_109 = arith.constant 0 : index
    %c0_110 = arith.constant 0 : index
    %c112_111 = arith.constant 112 : index
    %91 = vector.load %arg8[%c0_109, %c0_110, %c112_111] : memref<1x8x208xf32, #tpu.memory_space<vmem>>, vector<1x8x64xf32>
    %92 = vector.shape_cast %91 : vector<1x8x64xf32> to vector<8x64xf32>
    %c0_112 = arith.constant 0 : index
    %c0_113 = arith.constant 0 : index
    %93 = vector.load %arg9[%c0_112, %c0_113] : memref<72x64xf32, #tpu.memory_space<vmem>>, vector<8x64xf32>
    tpu.vector_store %arg9[%c0_112, %c0_113], %92 {strides = array<i32>} : memref<72x64xf32, #tpu.memory_space<vmem>>, vector<8x64xf32>,
    %c0_114 = arith.constant 0 : index
    %c0_115 = arith.constant 0 : index
    %c116 = arith.constant 116 : index
    %94 = vector.load %arg8[%c0_114, %c0_115, %c116] : memref<1x8x208xf32, #tpu.memory_space<vmem>>, vector<1x8x64xf32>
    %95 = vector.shape_cast %94 : vector<1x8x64xf32> to vector<8x64xf32>
    %c8_116 = arith.constant 8 : index
    %c0_117 = arith.constant 0 : index
    %96 = vector.load %arg9[%c8_116, %c0_117] : memref<72x64xf32, #tpu.memory_space<vmem>>, vector<8x64xf32>
    tpu.vector_store %arg9[%c8_116, %c0_117], %95 {strides = array<i32>} : memref<72x64xf32, #tpu.memory_space<vmem>>, vector<8x64xf32>,
    %c0_118 = arith.constant 0 : index
    %c0_119 = arith.constant 0 : index
    %c120_120 = arith.constant 120 : index
    %97 = vector.load %arg8[%c0_118, %c0_119, %c120_120] : memref<1x8x208xf32, #tpu.memory_space<vmem>>, vector<1x8x64xf32>
    %98 = vector.shape_cast %97 : vector<1x8x64xf32> to vector<8x64xf32>
    %c16_121 = arith.constant 16 : index
    %c0_122 = arith.constant 0 : index
    %99 = vector.load %arg9[%c16_121, %c0_122] : memref<72x64xf32, #tpu.memory_space<vmem>>, vector<8x64xf32>
    tpu.vector_store %arg9[%c16_121, %c0_122], %98 {strides = array<i32>} : memref<72x64xf32, #tpu.memory_space<vmem>>, vector<8x64xf32>,
    %c0_123 = arith.constant 0 : index
    %c0_124 = arith.constant 0 : index
    %c124_125 = arith.constant 124 : index
    %100 = vector.load %arg8[%c0_123, %c0_124, %c124_125] : memref<1x8x208xf32, #tpu.memory_space<vmem>>, vector<1x8x64xf32>
    %101 = vector.shape_cast %100 : vector<1x8x64xf32> to vector<8x64xf32>
    %c24_126 = arith.constant 24 : index
    %c0_127 = arith.constant 0 : index
    %102 = vector.load %arg9[%c24_126, %c0_127] : memref<72x64xf32, #tpu.memory_space<vmem>>, vector<8x64xf32>
    tpu.vector_store %arg9[%c24_126, %c0_127], %101 {strides = array<i32>} : memref<72x64xf32, #tpu.memory_space<vmem>>, vector<8x64xf32>,
    %c0_128 = arith.constant 0 : index
    %c0_129 = arith.constant 0 : index
    %c128_130 = arith.constant 128 : index
    %103 = vector.load %arg8[%c0_128, %c0_129, %c128_130] : memref<1x8x208xf32, #tpu.memory_space<vmem>>, vector<1x8x64xf32>
    %104 = vector.shape_cast %103 : vector<1x8x64xf32> to vector<8x64xf32>
    %c32_131 = arith.constant 32 : index
    %c0_132 = arith.constant 0 : index
    %105 = vector.load %arg9[%c32_131, %c0_132] : memref<72x64xf32, #tpu.memory_space<vmem>>, vector<8x64xf32>
    tpu.vector_store %arg9[%c32_131, %c0_132], %104 {strides = array<i32>} : memref<72x64xf32, #tpu.memory_space<vmem>>, vector<8x64xf32>,
    %c0_133 = arith.constant 0 : index
    %c0_134 = arith.constant 0 : index
    %c132_135 = arith.constant 132 : index
    %106 = vector.load %arg8[%c0_133, %c0_134, %c132_135] : memref<1x8x208xf32, #tpu.memory_space<vmem>>, vector<1x8x64xf32>
    %107 = vector.shape_cast %106 : vector<1x8x64xf32> to vector<8x64xf32>
    %c40_136 = arith.constant 40 : index
    %c0_137 = arith.constant 0 : index
    %108 = vector.load %arg9[%c40_136, %c0_137] : memref<72x64xf32, #tpu.memory_space<vmem>>, vector<8x64xf32>
    tpu.vector_store %arg9[%c40_136, %c0_137], %107 {strides = array<i32>} : memref<72x64xf32, #tpu.memory_space<vmem>>, vector<8x64xf32>,
    %c0_138 = arith.constant 0 : index
    %c0_139 = arith.constant 0 : index
    %c136_140 = arith.constant 136 : index
    %109 = vector.load %arg8[%c0_138, %c0_139, %c136_140] : memref<1x8x208xf32, #tpu.memory_space<vmem>>, vector<1x8x64xf32>
    %110 = vector.shape_cast %109 : vector<1x8x64xf32> to vector<8x64xf32>
    %c48_141 = arith.constant 48 : index
    %c0_142 = arith.constant 0 : index
    %111 = vector.load %arg9[%c48_141, %c0_142] : memref<72x64xf32, #tpu.memory_space<vmem>>, vector<8x64xf32>
    tpu.vector_store %arg9[%c48_141, %c0_142], %110 {strides = array<i32>} : memref<72x64xf32, #tpu.memory_space<vmem>>, vector<8x64xf32>,
    %c0_143 = arith.constant 0 : index
    %c0_144 = arith.constant 0 : index
    %c140 = arith.constant 140 : index
    %112 = vector.load %arg8[%c0_143, %c0_144, %c140] : memref<1x8x208xf32, #tpu.memory_space<vmem>>, vector<1x8x64xf32>
    %113 = vector.shape_cast %112 : vector<1x8x64xf32> to vector<8x64xf32>
    %c56_145 = arith.constant 56 : index
    %c0_146 = arith.constant 0 : index
    %114 = vector.load %arg9[%c56_145, %c0_146] : memref<72x64xf32, #tpu.memory_space<vmem>>, vector<8x64xf32>
    tpu.vector_store %arg9[%c56_145, %c0_146], %113 {strides = array<i32>} : memref<72x64xf32, #tpu.memory_space<vmem>>, vector<8x64xf32>,
    %c0_147 = arith.constant 0 : index
    %c0_148 = arith.constant 0 : index
    %c144 = arith.constant 144 : index
    %115 = vector.load %arg8[%c0_147, %c0_148, %c144] : memref<1x8x208xf32, #tpu.memory_space<vmem>>, vector<1x8x64xf32>
    %116 = vector.shape_cast %115 : vector<1x8x64xf32> to vector<8x64xf32>
    %c64_149 = arith.constant 64 : index
    %c0_150 = arith.constant 0 : index
    %117 = vector.load %arg9[%c64_149, %c0_150] : memref<72x64xf32, #tpu.memory_space<vmem>>, vector<8x64xf32>
    tpu.vector_store %arg9[%c64_149, %c0_150], %116 {strides = array<i32>} : memref<72x64xf32, #tpu.memory_space<vmem>>, vector<8x64xf32>,
    %c0_151 = arith.constant 0 : index
    %c0_152 = arith.constant 0 : index
    %118 = vector.load %arg9[%c0_151, %c0_152] : memref<72x64xf32, #tpu.memory_space<vmem>>, vector<72x64xf32>
    %c2 = arith.constant 2 : index
    %c0_153 = arith.constant 0 : index
    %c0_154 = arith.constant 0 : index
    %119 = vector.load %arg2[%c2, %c0_153, %c0_154] : memref<3x8x72xf32, #tpu.memory_space<vmem>>, vector<1x8x72xf32>
    %120 = vector.shape_cast %119 : vector<1x8x72xf32> to vector<8x72xf32>
    %cst_155 = arith.constant dense<0.000000e+00> : vector<8x64xf32>
    %121 = tpu.matmul %120, %118, %cst_155 {dimension_numbers = #tpu.dot_dimension_numbers<[1], [0], [0], [1], [0, 0, 1, 1], [], []>} : vector<8x72xf32>, vector<72x64xf32>, vector<8x64xf32> -> vector<8x64xf32>
    %c2_156 = arith.constant 2 : index
    %c0_157 = arith.constant 0 : index
    %c0_158 = arith.constant 0 : index
    %122 = vector.load %arg3[%c2_156, %c0_157, %c0_158] : memref<3x8x1xf32, #tpu.memory_space<vmem>>, vector<1x8x1xf32>
    %123 = vector.shape_cast %122 : vector<1x8x1xf32> to vector<8x1xf32>
    %124 = vector.broadcast %123 : vector<8x1xf32> to vector<8x64xf32>
    %125 = arith.cmpf ogt, %121, %124 : vector<8x64xf32>
    %126 = arith.extui %125 : vector<8x64xi1> to vector<8x64xi32>
    %127 = arith.sitofp %126 : vector<8x64xi32> to vector<8x64xf32>
    %c0_159 = arith.constant 0 : index
    %c0_160 = arith.constant 0 : index
    %128 = vector.load %arg6[%c0_159, %c0_160] : memref<64x1xf32, #tpu.memory_space<vmem>>, vector<64x1xf32>
    %cst_161 = arith.constant dense<0.000000e+00> : vector<8x1xf32>
    %129 = tpu.matmul %127, %128, %cst_161 {dimension_numbers = #tpu.dot_dimension_numbers<[1], [0], [0], [1], [0, 0, 1, 1], [], []>} : vector<8x64xf32>, vector<64x1xf32>, vector<8x1xf32> -> vector<8x1xf32>
    %c0_162 = arith.constant 0 : index
    %c16_163 = arith.constant 16 : index
    %130 = vector.load %arg4[%c0_162, %c16_163] : memref<8x24xf32, #tpu.memory_space<vmem>>, vector<8x8xf32>
    %cst_164 = arith.constant dense<0.000000e+00> : vector<8x1xf32>
    %131 = tpu.matmul %130, %129, %cst_164 {dimension_numbers = #tpu.dot_dimension_numbers<[1], [0], [0], [1], [0, 0, 1, 1], [], []>} : vector<8x8xf32>, vector<8x1xf32>, vector<8x1xf32> -> vector<8x1xf32>
    %132 = arith.addf %90, %131 : vector<8x1xf32>
    %133 = tpu.transpose %132, [1, 0] : vector<8x1xf32> -> vector<1x8xf32>
    %c0_165 = arith.constant 0 : index
    %c0_166 = arith.constant 0 : index
    %134 = vector.load %arg5[%c0_165, %c0_166] : memref<1x8xf32, #tpu.memory_space<vmem>>, vector<1x8xf32>
    %135 = arith.addf %133, %134 : vector<1x8xf32>
    %c0_167 = arith.constant 0 : index
    %c0_168 = arith.constant 0 : index
    %c0_169 = arith.constant 0 : index
    %136 = vector.load %arg7[%c0_167, %c0_168, %c0_169] : memref<1x1x8xf32, #tpu.memory_space<vmem>>, vector<1x1x8xf32>
    %137 = vector.shape_cast %136 : vector<1x1x8xf32> to vector<1x8xf32>
    %138 = vector.shape_cast %135 : vector<1x8xf32> to vector<1x1x8xf32>
    tpu.vector_store %arg7[%c0_167, %c0_168, %c0_169], %138 {strides = array<i32>} : memref<1x1x8xf32, #tpu.memory_space<vmem>>, vector<1x1x8xf32>,
    return
  }
  func.func @transform_0(%arg0: i32) -> (i32, i32, i32) {
    %c0_i32 = arith.constant 0 : i32
    %c0_i32_0 = arith.constant 0 : i32
    %c0_i32_1 = arith.constant 0 : i32
    return %arg0, %c0_i32, %c0_i32_0 : i32, i32, i32
  }
  func.func @transform_1(%arg0: i32) -> (i32, i32, i32) {
    %c0_i32 = arith.constant 0 : i32
    %c0_i32_0 = arith.constant 0 : i32
    %c0_i32_1 = arith.constant 0 : i32
    %c0_i32_2 = arith.constant 0 : i32
    return %c0_i32, %c0_i32_0, %c0_i32_1 : i32, i32, i32
  }
  func.func @transform_2(%arg0: i32) -> (i32, i32, i32) {
    %c0_i32 = arith.constant 0 : i32
    %c0_i32_0 = arith.constant 0 : i32
    %c0_i32_1 = arith.constant 0 : i32
    %c0_i32_2 = arith.constant 0 : i32
    return %c0_i32, %c0_i32_0, %c0_i32_1 : i32, i32, i32
  }
  func.func @transform_3(%arg0: i32) -> (i32, i32) {
    %c0_i32 = arith.constant 0 : i32
    %c0_i32_0 = arith.constant 0 : i32
    %c0_i32_1 = arith.constant 0 : i32
    return %c0_i32, %c0_i32_0 : i32, i32
  }
  func.func @transform_4(%arg0: i32) -> (i32, i32) {
    %c0_i32 = arith.constant 0 : i32
    %c0_i32_0 = arith.constant 0 : i32
    %c0_i32_1 = arith.constant 0 : i32
    return %c0_i32, %c0_i32_0 : i32, i32
  }
  func.func @transform_5(%arg0: i32) -> (i32, i32) {
    %c0_i32 = arith.constant 0 : i32
    %c0_i32_0 = arith.constant 0 : i32
    %c0_i32_1 = arith.constant 0 : i32
    return %c0_i32, %c0_i32_0 : i32, i32
  }
  func.func @transform_6(%arg0: i32) -> (i32, i32, i32) {
    %c0_i32 = arith.constant 0 : i32
    %c0_i32_0 = arith.constant 0 : i32
    %c0_i32_1 = arith.constant 0 : i32
    return %arg0, %c0_i32, %c0_i32_0 : i32, i32, i32
  }
}

</mosaic_0001>

<llo_original>
// kernel: neg.1
$region0: #{neg.1}
  #allocation0 [shape = 's32[1]{0}', space=sflag, size = 0x4, scoped, tag = 'scoped memory for neg.1']
  %s0 = inlined_call_operand.vmem [shape: f32[24], index: 0, kind: input, shape index: {}]
  %s1 = inlined_call_operand.vmem [shape: f32[24], index: 1, kind: output, shape index: {}]
  %v2 = vld [vmem:[%s0] sm:$0x1]
  %3 = xla_tuple %v2
  %4 = xla_tuple %3
  %v5 = vxor.u32 %v2, 2147483648
  %6 = xla_tuple %v5
  %7 = vst [vmem:[%s1] sm:$0x1] %v5

// kernel: rocket_forward.1
$region0: #{rocket_forward.1}
  #allocation0 [shape = 'u32[]', space=smem, size = 0x4, offset = 0x4, fixed_abs, tag = 'smem constant byte address 0x4 - core index']
  #allocation1 [shape = 'u32[72,128]{1,0:T(1,128)}', space=vmem, size = 0x9000, scoped, tag = 'internal scratch']
  #allocation2 [shape = 'f32[1,8,208]{2,1,0:T(8,128)}', space=vmem, size = 0x2000, scoped, tag = 'scratch operand']
  #allocation3 [shape = 'f32[72,64]{1,0:T(8,128)}', space=vmem, size = 0x9000, scoped, tag = 'scratch operand']
  %s0 = inlined_call_operand.vmem [shape: f32[2,8,64], index: 0, kind: input, shape index: {}]
  %s1 = inlined_call_operand.vmem [shape: f32[3,8,72], index: 1, kind: input, shape index: {}]
  %s2 = inlined_call_operand.vmem [shape: f32[3,8,1], index: 2, kind: input, shape index: {}]
  %s3 = inlined_call_operand.vmem [shape: f32[8,24], index: 3, kind: input, shape index: {}]
  %s4 = inlined_call_operand.vmem [shape: f32[1,8], index: 4, kind: input, shape index: {}]
  %s5 = inlined_call_operand.vmem [shape: f32[64,1], index: 5, kind: input, shape index: {}]
  %s6 = inlined_call_operand.hbm [shape: f32[2,1,8], index: 6, kind: output, shape index: {}]
  %s7 = sld [smem:[#allocation0]]
  $region57: #{rocket_forward.1} parent=0
    _
  %s9 = ssub.s32 1, %s7
  %s10 = scalar_select 0, %s9, %s7
  $region1: #{rocket_forward.1} parent=0
    #allocation4 [shape = 'u8[1024]{0}', space=vmem, size = 0x400, scoped, tag = 'output window, operand 0']
    #allocation5 [shape = 's32[2]{0}', space=sflag, size = 0x8, scoped, tag = 'scoped memory for rocket_forward.1']
    %11 = vsyncpa [#allocation5], 0
    %s12 = scalar_lea.sflag [#allocation5], 1
    %13 = vsyncpa %s12, 0
    loop: start=0, step=1, limit=4
    $region2: #{rocket_forward.1} parent=1 // loop_pre_header
      _
    $region3: #{rocket_forward.1} parent=1 // loop_header
      %s15 = sphi 0, %s19
      %p16 = scmp.ge.s32.totalorder %s15, 4
      %s25 = sphi 0, %s27
      %s28 = sphi 0, %s25
      %s29 = sphi 0, %s28
      %s45 = sphi 0, %s29
      %s49 = sphi 0, %s49
      %s51 = sphi 0, %s49
      %s52 = sphi 0, %s51
      %s66 = sphi 0, %s52
      %s70 = sphi 0, %s70
      %s72 = sphi 0, %s70
      %s73 = sphi 0, %s72
      %s87 = sphi 0, %s73
      %s91 = sphi 0, %s91
      %s93 = sphi 0, %s91
      %s94 = sphi 0, %s93
      %s108 = sphi 0, %s94
      %s112 = sphi 0, %s112
      %s114 = sphi 0, %s112
      %s115 = sphi 0, %s114
      %s129 = sphi 0, %s115
      %s133 = sphi 0, %s133
      %s135 = sphi 0, %s133
      %s136 = sphi 0, %s135
      %s150 = sphi 0, %s136
      %s156 = sphi 0, %s158
      %s159 = sphi 0, %s156
      %s160 = sphi 0, %s159
      %s176 = sphi 0, %s160
    $region4: #{rocket_forward.1} parent=1 // loop_header_branch
      %18 = sbr.rel (%p16) target = $region8
    $region5: #{rocket_forward.1} parent=1 // loop_body
      %s20 = ssub.s32 %s15, 1
      %s21 = ssub.s32 %s15, 2
      %s22 = sadd.s32 %s15, 1
      %s23 = ssub.s32 %s15, %s22
      %p24 = scmp.eq.s32.totalorder %s23, 0
      %s26 = sadd.s32 %s25, 1
      %s27 = scalar_select %p24, %s25, %s26
      %p30 = pneg %p24
      %p31 = scmp.eq.s32.totalorder %s15, 1
      %p32 = por %p30, %p31
      %p33 = scmp.ne.s32.totalorder %s25, %s28
      %p34 = scmp.eq.s32.totalorder %s15, 0
      %p35 = por %p33, %p34
      %p36 = scmp.ne.s32.totalorder %s25, %s28
      %p37 = scmp.eq.s32.totalorder %s20, 1
      %p38 = por %p36, %p37
      %p39 = scmp.ne.s32.totalorder %s28, %s29
      %p40 = scmp.eq.s32.totalorder %s20, 0
      %p41 = por %p39, %p40
      %p42 = scmp.ne.s32.totalorder %s28, %s29
      %p43 = scmp.eq.s32.totalorder %s21, 1
      %p44 = por %p42, %p43
      %p46 = scmp.ne.s32.totalorder %s29, %s45
      %p47 = scmp.eq.s32.totalorder %s21, 0
      %p48 = por %p46, %p47
      %s50 = sadd.s32 %s49, 1
      %p53 = scmp.eq.s32.totalorder %s15, 1
      %p54 = scmp.ne.s32.totalorder %s49, %s51
      %p55 = scmp.eq.s32.totalorder %s15, 0
      %p56 = por %p54, %p55
      %p57 = scmp.ne.s32.totalorder %s49, %s51
      %p58 = scmp.eq.s32.totalorder %s20, 1
      %p59 = por %p57, %p58
      %p60 = scmp.ne.s32.totalorder %s51, %s52
      %p61 = scmp.eq.s32.totalorder %s20, 0
      %p62 = por %p60, %p61
      %p63 = scmp.ne.s32.totalorder %s51, %s52
      %p64 = scmp.eq.s32.totalorder %s21, 1
      %p65 = por %p63, %p64
      %p67 = scmp.ne.s32.totalorder %s52, %s66
      %p68 = scmp.eq.s32.totalorder %s21, 0
      %p69 = por %p67, %p68
      %s71 = sadd.s32 %s70, 1
      %p74 = scmp.eq.s32.totalorder %s15, 1
      %p75 = scmp.ne.s32.totalorder %s70, %s72
      %p76 = scmp.eq.s32.totalorder %s15, 0
      %p77 = por %p75, %p76
      %p78 = scmp.ne.s32.totalorder %s70, %s72
      %p79 = scmp.eq.s32.totalorder %s20, 1
      %p80 = por %p78, %p79
      %p81 = scmp.ne.s32.totalorder %s72, %s73
      %p82 = scmp.eq.s32.totalorder %s20, 0
      %p83 = por %p81, %p82
      %p84 = scmp.ne.s32.totalorder %s72, %s73
      %p85 = scmp.eq.s32.totalorder %s21, 1
      %p86 = por %p84, %p85
      %p88 = scmp.ne.s32.totalorder %s73, %s87
      %p89 = scmp.eq.s32.totalorder %s21, 0
      %p90 = por %p88, %p89
      %s92 = sadd.s32 %s91, 1
      %p95 = scmp.eq.s32.totalorder %s15, 1
      %p96 = scmp.ne.s32.totalorder %s91, %s93
      %p97 = scmp.eq.s32.totalorder %s15, 0
      %p98 = por %p96, %p97
      %p99 = scmp.ne.s32.totalorder %s91, %s93
      %p100 = scmp.eq.s32.totalorder %s20, 1
      %p101 = por %p99, %p100
      %p102 = scmp.ne.s32.totalorder %s93, %s94
      %p103 = scmp.eq.s32.totalorder %s20, 0
      %p104 = por %p102, %p103
      %p105 = scmp.ne.s32.totalorder %s93, %s94
      %p106 = scmp.eq.s32.totalorder %s21, 1
      %p107 = por %p105, %p106
      %p109 = scmp.ne.s32.totalorder %s94, %s108
      %p110 = scmp.eq.s32.totalorder %s21, 0
      %p111 = por %p109, %p110
      %s113 = sadd.s32 %s112, 1
      %p116 = scmp.eq.s32.totalorder %s15, 1
      %p117 = scmp.ne.s32.totalorder %s112, %s114
      %p118 = scmp.eq.s32.totalorder %s15, 0
      %p119 = por %p117, %p118
      %p120 = scmp.ne.s32.totalorder %s112, %s114
      %p121 = scmp.eq.s32.totalorder %s20, 1
      %p122 = por %p120, %p121
      %p123 = scmp.ne.s32.totalorder %s114, %s115
      %p124 = scmp.eq.s32.totalorder %s20, 0
      %p125 = por %p123, %p124
      %p126 = scmp.ne.s32.totalorder %s114, %s115
      %p127 = scmp.eq.s32.totalorder %s21, 1
      %p128 = por %p126, %p127
      %p130 = scmp.ne.s32.totalorder %s115, %s129
      %p131 = scmp.eq.s32.totalorder %s21, 0
      %p132 = por %p130, %p131
      %s134 = sadd.s32 %s133, 1
      %p137 = scmp.eq.s32.totalorder %s15, 1
      %p138 = scmp.ne.s32.totalorder %s133, %s135
      %p139 = scmp.eq.s32.totalorder %s15, 0
      %p140 = por %p138, %p139
      %p141 = scmp.ne.s32.totalorder %s133, %s135
      %p142 = scmp.eq.s32.totalorder %s20, 1
      %p143 = por %p141, %p142
      %p144 = scmp.ne.s32.totalorder %s135, %s136
      %p145 = scmp.eq.s32.totalorder %s20, 0
      %p146 = por %p144, %p145
      %p147 = scmp.ne.s32.totalorder %s135, %s136
      %p148 = scmp.eq.s32.totalorder %s21, 1
      %p149 = por %p147, %p148
      %p151 = scmp.ne.s32.totalorder %s136, %s150
      %p152 = scmp.eq.s32.totalorder %s21, 0
      %p153 = por %p151, %p152
      %s154 = ssub.s32 %s15, %s22
      %p155 = scmp.eq.s32.totalorder %s154, 0
      %s157 = sadd.s32 %s156, 1
      %s158 = scalar_select %p155, %s156, %s157
      %p161 = pneg %p155
      %p162 = scmp.eq.s32.totalorder %s15, 1
      %p163 = por %p161, %p162
      %p164 = scmp.ne.s32.totalorder %s156, %s159
      %p165 = scmp.eq.s32.totalorder %s15, 0
      %p166 = por %p164, %p165
      %p167 = scmp.ne.s32.totalorder %s156, %s159
      %p168 = scmp.eq.s32.totalorder %s20, 1
      %p169 = por %p167, %p168
      %p170 = scmp.ne.s32.totalorder %s159, %s160
      %p171 = scmp.eq.s32.totalorder %s20, 0
      %p172 = por %p170, %p171
      %p173 = scmp.ne.s32.totalorder %s159, %s160
      %p174 = scmp.eq.s32.totalorder %s21, 1
      %p175 = por %p173, %p174
      %p177 = scmp.ne.s32.totalorder %s160, %s176
      %p178 = scmp.eq.s32.totalorder %s21, 0
      %p179 = por %p177, %p178
      %p180 = scmp.le.s32.totalorder 1, %s15
      %p181 = scmp.lt.s32.totalorder %s15, 3
      %p182 = pnand %p180, %p181
      %p183 = pneg %p182
      // Predicated region
      $region9: #{rocket_forward.1} parent=5 // pred_check
        _
      $region10: #{rocket_forward.1} parent=5 // pred_check_branch
        %185 = sbr.rel (%p182) target = $region12
      $region11: #{rocket_forward.1} parent=5 // pred_region
        %s186 = ssub.s32 %s15, 1
        // Predicated region
        $region13: #{rocket_forward.1} parent=11 // pred_check
          %p187 = pneg %p62
        $region14: #{rocket_forward.1} parent=11 // pred_check_branch
          %189 = sbr.rel (%p187) target = $region16
        $region15: #{rocket_forward.1} parent=11 // pred_region
          _
        $region16: #{rocket_forward.1} parent=11 // pred_fallthru
          _
        // Predicated region
        $region17: #{rocket_forward.1} parent=11 // pred_check
          %p190 = pneg %p83
        $region18: #{rocket_forward.1} parent=11 // pred_check_branch
          %192 = sbr.rel (%p190) target = $region20
        $region19: #{rocket_forward.1} parent=11 // pred_region
          _
        $region20: #{rocket_forward.1} parent=11 // pred_fallthru
          _
        // Predicated region
        $region21: #{rocket_forward.1} parent=11 // pred_check
          %p193 = pneg %p104
        $region22: #{rocket_forward.1} parent=11 // pred_check_branch
          %195 = sbr.rel (%p193) target = $region24
        $region23: #{rocket_forward.1} parent=11 // pred_region
          _
        $region24: #{rocket_forward.1} parent=11 // pred_fallthru
          _
        // Predicated region
        $region25: #{rocket_forward.1} parent=11 // pred_check
          %p196 = pneg %p125
        $region26: #{rocket_forward.1} parent=11 // pred_check_branch
          %198 = sbr.rel (%p196) target = $region28
        $region27: #{rocket_forward.1} parent=11 // pred_region
          _
        $region28: #{rocket_forward.1} parent=11 // pred_fallthru
          _
        // Predicated region
        $region29: #{rocket_forward.1} parent=11 // pred_check
          %p199 = pneg %p146
        $region30: #{rocket_forward.1} parent=11 // pred_check_branch
          %201 = sbr.rel (%p199) target = $region32
        $region31: #{rocket_forward.1} parent=11 // pred_region
          _
        $region32: #{rocket_forward.1} parent=11 // pred_fallthru
          _
      $region12: #{rocket_forward.1} parent=5 // pred_fallthru
        _
      %p202 = scmp.lt.s32.totalorder %s15, 2
      // Predicated region
      $region33: #{rocket_forward.1} parent=5 // pred_check
        %p203 = pneg %p202
      $region34: #{rocket_forward.1} parent=5 // pred_check_branch
        %205 = sbr.rel (%p203) target = $region36
      $region35: #{rocket_forward.1} parent=5 // pred_region
        // Predicated region
        $region37: #{rocket_forward.1} parent=35 // pred_check
          %p206 = pneg %p35
        $region38: #{rocket_forward.1} parent=35 // pred_check_branch
          %208 = sbr.rel (%p206) target = $region40
        $region39: #{rocket_forward.1} parent=35 // pred_region
          %p209 = scmp.lt.s32.totalorder %s15, 1
          %s210 = scalar_select %p209, %s15, 1
          %s211 = smul.addr %s210, 8
          %s212 = scalar_lea.vmem %s0, %s211
        $region40: #{rocket_forward.1} parent=35 // pred_fallthru
          _
      $region36: #{rocket_forward.1} parent=5 // pred_fallthru
        _
      %p213 = scmp.le.s32.totalorder 1, %s15
      %p214 = scmp.lt.s32.totalorder %s15, 3
      %p215 = pnand %p213, %p214
      %p216 = pneg %p215
      // Predicated region
      $region41: #{rocket_forward.1} parent=5 // pred_check
        _
      $region42: #{rocket_forward.1} parent=5 // pred_check_branch
        %218 = sbr.rel (%p215) target = $region44
      $region43: #{rocket_forward.1} parent=5 // pred_region
        %s219 = ssub.s32 %s15, 1
        %p220 = scmp.lt.s32.totalorder %s20, 1
        %s221 = scalar_select %p220, %s20, 1
        %s222 = smul.addr %s221, 8
        %s223 = scalar_lea.vmem %s0, %s222
        %p224 = pneg %p41
        %p225 = pneg %p38
        %p226 = pneg %p62
        %p227 = pneg %p59
        %p228 = pneg %p83
        %p229 = pneg %p80
        %p230 = pneg %p104
        %p231 = pneg %p101
        %p232 = pneg %p125
        %p233 = pneg %p122
        %p234 = pneg %p146
        %p235 = pneg %p143
        %p236 = pneg %p172
        %p237 = pneg %p169
        %s238 = sand.u32 %s159, 1
        %s239 = scalar_lea.sflag [#allocation5], %s238
        %s240 = sand.u32 %s159, 1
        %s241 = scalar_lea.vmem [#allocation4], %s240
        %p242 = scmp.lt.s32.totalorder %s20, 1
        %s243 = scalar_select %p242, %s20, 1
        %s244 = smul.addr %s243, 8
        %s245 = scalar_lea.vmem %s0, %s244
        %vm246 = vcmask 1048448
        %247 = vst.msk [vmem:[#allocation2] sm:$0xff] %vm246, 0.0
        %vm248 = vcmask 654848
        %249 = vst.msk [vmem:[#allocation2 + $0x8] sm:$0xff] %vm248, 0.0
        %v250 = vld [vmem:[%s245] sm:$0xff]
        %vm251 = vcmask 523264
        %252 = vst.msk [vmem:[#allocation2 + $0x8] sm:$0xff] %vm251, %v250
        %v253 = vld [vmem:[#allocation2] sm:$0xff]
        %v254 = vld [vmem:[#allocation2 + $0x8] sm:$0xff]
        %257 = vrot.lane.b32.xlu0 %v253, 4
        %v258 = vpop.permute.xlu0 %257
        %259 = vrot.lane.b32.xlu0 %v254, 4
        %v260 = vpop.permute.xlu0 %259
        %vm261 = vcmask 31744
        %v262 = vsel %vm261, %v258, %v260
        %264 = vst.msk [vmem:[#allocation3] sm:$0xff] %vm251, %v262
        %v265 = vld [vmem:[#allocation2] sm:$0xff]
        %v266 = vld [vmem:[#allocation2 + $0x8] sm:$0xff]
        %269 = vrot.lane.b32.xlu0 %v265, 3
        %v270 = vpop.permute.xlu0 %269
        %271 = vrot.lane.b32.xlu0 %v266, 3
        %v272 = vpop.permute.xlu0 %271
        %vm273 = vcmask 23552
        %v274 = vsel %vm273, %v270, %v272
        %276 = vst.msk [vmem:[#allocation3 + $0x8] sm:$0xff] %vm251, %v274
        %v277 = vld [vmem:[#allocation2] sm:$0xff]
        %v278 = vld [vmem:[#allocation2 + $0x8] sm:$0xff]
        %281 = vrot.lane.b32.xlu0 %v277, 2
        %v282 = vpop.permute.xlu0 %281
        %283 = vrot.lane.b32.xlu0 %v278, 2
        %v284 = vpop.permute.xlu0 %283
        %vm285 = vcmask 15360
        %v286 = vsel %vm285, %v282, %v284
        %288 = vst.msk [vmem:[#allocation3 + $0x10] sm:$0xff] %vm251, %v286
        %v289 = vld [vmem:[#allocation2] sm:$0xff]
        %v290 = vld [vmem:[#allocation2 + $0x8] sm:$0xff]
        %293 = vrot.lane.b32.xlu0 %v289, 1
        %v294 = vpop.permute.xlu0 %293
        %295 = vrot.lane.b32.xlu0 %v290, 1
        %v296 = vpop.permute.xlu0 %295
        %vm297 = vcmask 7168
        %v298 = vsel %vm297, %v294, %v296
        %300 = vst.msk [vmem:[#allocation3 + $0x18] sm:$0xff] %vm251, %v298
        %v301 = vld [vmem:[#allocation2 + $0x8] sm:$0xff]
        %302 = vst.msk [vmem:[#allocation3 + $0x20] sm:$0xff] %vm251, %v301
        %v303 = vld [vmem:[#allocation2 + $0x8] sm:$0xff]
        %305 = vrot.lane.b32.xlu0 %v303, 127
        %v306 = vpop.permute.xlu0 %305
        %308 = vst.msk [vmem:[#allocation3 + $0x28] sm:$0xff] %vm251, %v306
        %v309 = vld [vmem:[#allocation2 + $0x8] sm:$0xff]
        %311 = vrot.lane.b32.xlu0 %v309, 126
        %v312 = vpop.permute.xlu0 %311
        %314 = vst.msk [vmem:[#allocation3 + $0x30] sm:$0xff] %vm251, %v312
        %v315 = vld [vmem:[#allocation2 + $0x8] sm:$0xff]
        %317 = vrot.lane.b32.xlu0 %v315, 125
        %v318 = vpop.permute.xlu0 %317
        %320 = vst.msk [vmem:[#allocation3 + $0x38] sm:$0xff] %vm251, %v318
        %v321 = vld [vmem:[#allocation2 + $0x8] sm:$0xff]
        %323 = vrot.lane.b32.xlu0 %v321, 124
        %v324 = vpop.permute.xlu0 %323
        %326 = vst.msk [vmem:[#allocation3 + $0x40] sm:$0xff] %vm251, %v324
        %v327 = vld [vmem:[#allocation3] sm:$0xff]
        %v328 = vld [vmem:[#allocation3 + $0x8] sm:$0xff]
        %v329 = vld [vmem:[#allocation3 + $0x10] sm:$0xff]
        %v330 = vld [vmem:[#allocation3 + $0x18] sm:$0xff]
        %v331 = vld [vmem:[#allocation3 + $0x20] sm:$0xff]
        %v332 = vld [vmem:[#allocation3 + $0x28] sm:$0xff]
        %v333 = vld [vmem:[#allocation3 + $0x30] sm:$0xff]
        %v334 = vld [vmem:[#allocation3 + $0x38] sm:$0xff]
        %v335 = vld [vmem:[#allocation3 + $0x40] sm:$0xff]
        %v336 = vld [vmem:[%s1] sm:$0xff]
        %vm337 = vcmask 588800
        %v339 = vsel %vm337, %v336, 0
        %341 = vmatpush.msra.mxu0 0.0
        %342 = vmatpush.msra.mxu0 0.0
        %343 = vmatpush.msra.mxu0 0.0
        %344 = vmatpush.msra.mxu0 0.0
        %345 = vmatpush.msra.mxu0 0.0
        %346 = vmatpush.msra.mxu0 0.0
        %347 = vmatpush.msra.mxu0 0.0
        %348 = vmatpush.msra.mxu0 %v335
        %349 = vmatpush.msra.mxu0 %v334
        %350 = vmatpush.msra.mxu0 %v333
        %351 = vmatpush.msra.mxu0 %v332
        %352 = vmatpush.msra.mxu0 %v331
        %353 = vmatpush.msra.mxu0 %v330
        %354 = vmatpush.msra.mxu0 %v329
        %355 = vmatpush.msra.mxu0 %v328
        %356 = vmatpush.msra.mxu0 %v327
        %357 = vmatmul.f32.gmra.mxu0 %v339
        %v358 = vpop.f32.mrf.mxu0
        %v359 = vadd.f32 0.0, %v358
        %360 = vdwg.mxu0
        %v361 = vld [vmem:[%s2] sm:$0xff]
        %363 = vset.pattern.permute.xlu0 0
        %364 = vperm.xlu0 %363, %v361
        %v365 = vpop.permute.xlu0 %364
        %vm367 = vcmp.gt.f32.partialorder %v359, %v365
        %v368 = vsel %vm367, 1, 0
        %v369 = vcvt.s32.f32 %v368
        %v370 = vld [vmem:[%s5] sm:$0xff]
        %v371 = vld [vmem:[%s5 + $0x8] sm:$0xff]
        %v372 = vld [vmem:[%s5 + $0x10] sm:$0xff]
        %v373 = vld [vmem:[%s5 + $0x18] sm:$0xff]
        %v374 = vld [vmem:[%s5 + $0x20] sm:$0xff]
        %v375 = vld [vmem:[%s5 + $0x28] sm:$0xff]
        %v376 = vld [vmem:[%s5 + $0x30] sm:$0xff]
        %v377 = vld [vmem:[%s5 + $0x38] sm:$0xff]
        %v379 = vsel %vm251, %v369, 0
        %381 = vmatpush.msra.mxu0 0.0
        %382 = vmatpush.msra.mxu0 0.0
        %383 = vmatpush.msra.mxu0 0.0
        %384 = vmatpush.msra.mxu0 0.0
        %385 = vmatpush.msra.mxu0 0.0
        %386 = vmatpush.msra.mxu0 0.0
        %387 = vmatpush.msra.mxu0 0.0
        %388 = vmatpush.msra.mxu0 0.0
        %389 = vmatpush.msra.mxu0 %v377
        %390 = vmatpush.msra.mxu0 %v376
        %391 = vmatpush.msra.mxu0 %v375
        %392 = vmatpush.msra.mxu0 %v374
        %393 = vmatpush.msra.mxu0 %v373
        %394 = vmatpush.msra.mxu0 %v372
        %395 = vmatpush.msra.mxu0 %v371
        %396 = vmatpush.msra.mxu0 %v370
        %397 = vmatmul.f32.gmra.mxu0 %v379
        %v398 = vpop.f32.mrf.mxu0
        %v399 = vadd.f32 0.0, %v398
        %400 = vdwg.mxu0
        %v401 = vld [vmem:[%s3] sm:$0xff]
        %v402 = vld [vmem:[#allocation2] sm:$0xff]
        %v403 = vld [vmem:[#allocation2 + $0x8] sm:$0xff]
        %406 = vrot.lane.b32.xlu0 %v402, 8
        %v407 = vpop.permute.xlu0 %406
        %408 = vrot.lane.b32.xlu0 %v403, 8
        %v409 = vpop.permute.xlu0 %408
        %vm410 = vcmask 64512
        %v411 = vsel %vm410, %v407, %v409
        %413 = vst.msk [vmem:[#allocation3] sm:$0xff] %vm251, %v411
        %v414 = vld [vmem:[#allocation2] sm:$0xff]
        %v415 = vld [vmem:[#allocation2 + $0x8] sm:$0xff]
        %418 = vrot.lane.b32.xlu0 %v414, 6
        %v419 = vpop.permute.xlu0 %418
        %420 = vrot.lane.b32.xlu0 %v415, 6
        %v421 = vpop.permute.xlu0 %420
        %vm422 = vcmask 48128
        %v423 = vsel %vm422, %v419, %v421
        %425 = vst.msk [vmem:[#allocation3 + $0x8] sm:$0xff] %vm251, %v423
        %v426 = vld [vmem:[#allocation2] sm:$0xff]
        %v427 = vld [vmem:[#allocation2 + $0x8] sm:$0xff]
        %430 = vrot.lane.b32.xlu0 %v426, 4
        %v431 = vpop.permute.xlu0 %430
        %432 = vrot.lane.b32.xlu0 %v427, 4
        %v433 = vpop.permute.xlu0 %432
        %v434 = vsel %vm261, %v431, %v433
        %436 = vst.msk [vmem:[#allocation3 + $0x10] sm:$0xff] %vm251, %v434
        %v437 = vld [vmem:[#allocation2] sm:$0xff]
        %v438 = vld [vmem:[#allocation2 + $0x8] sm:$0xff]
        %441 = vrot.lane.b32.xlu0 %v437, 2
        %v442 = vpop.permute.xlu0 %441
        %443 = vrot.lane.b32.xlu0 %v438, 2
        %v444 = vpop.permute.xlu0 %443
        %v445 = vsel %vm285, %v442, %v444
        %447 = vst.msk [vmem:[#allocation3 + $0x18] sm:$0xff] %vm251, %v445
        %v448 = vld [vmem:[#allocation2 + $0x8] sm:$0xff]
        %449 = vst.msk [vmem:[#allocation3 + $0x20] sm:$0xff] %vm251, %v448
        %v450 = vld [vmem:[#allocation2 + $0x8] sm:$0xff]
        %452 = vrot.lane.b32.xlu0 %v450, 126
        %v453 = vpop.permute.xlu0 %452
        %455 = vst.msk [vmem:[#allocation3 + $0x28] sm:$0xff] %vm251, %v453
        %v456 = vld [vmem:[#allocation2 + $0x8] sm:$0xff]
        %458 = vrot.lane.b32.xlu0 %v456, 124
        %v459 = vpop.permute.xlu0 %458
        %461 = vst.msk [vmem:[#allocation3 + $0x30] sm:$0xff] %vm251, %v459
        %v462 = vld [vmem:[#allocation2 + $0x8] sm:$0xff]
        %464 = vrot.lane.b32.xlu0 %v462, 122
        %v465 = vpop.permute.xlu0 %464
        %467 = vst.msk [vmem:[#allocation3 + $0x38] sm:$0xff] %vm251, %v465
        %v468 = vld [vmem:[#allocation2 + $0x8] sm:$0xff]
        %470 = vrot.lane.b32.xlu0 %v468, 120
        %v471 = vpop.permute.xlu0 %470
        %473 = vst.msk [vmem:[#allocation3 + $0x40] sm:$0xff] %vm251, %v471
        %v474 = vld [vmem:[#allocation3] sm:$0xff]
        %v475 = vld [vmem:[#allocation3 + $0x8] sm:$0xff]
        %v476 = vld [vmem:[#allocation3 + $0x10] sm:$0xff]
        %v477 = vld [vmem:[#allocation3 + $0x18] sm:$0xff]
        %v478 = vld [vmem:[#allocation3 + $0x20] sm:$0xff]
        %v479 = vld [vmem:[#allocation3 + $0x28] sm:$0xff]
        %v480 = vld [vmem:[#allocation3 + $0x30] sm:$0xff]
        %v481 = vld [vmem:[#allocation3 + $0x38] sm:$0xff]
        %v482 = vld [vmem:[#allocation3 + $0x40] sm:$0xff]
        %s483 = scalar_lea.vmem %s1, 8
        %v484 = vld [vmem:[%s483] sm:$0xff]
        %v486 = vsel %vm337, %v484, 0
        %488 = vmatpush.msra.mxu0 0.0
        %489 = vmatpush.msra.mxu0 0.0
        %490 = vmatpush.msra.mxu0 0.0
        %491 = vmatpush.msra.mxu0 0.0
        %492 = vmatpush.msra.mxu0 0.0
        %493 = vmatpush.msra.mxu0 0.0
        %494 = vmatpush.msra.mxu0 0.0
        %495 = vmatpush.msra.mxu0 %v482
        %496 = vmatpush.msra.mxu0 %v481
        %497 = vmatpush.msra.mxu0 %v480
        %498 = vmatpush.msra.mxu0 %v479
        %499 = vmatpush.msra.mxu0 %v478
        %500 = vmatpush.msra.mxu0 %v477
        %501 = vmatpush.msra.mxu0 %v476
        %502 = vmatpush.msra.mxu0 %v475
        %503 = vmatpush.msra.mxu0 %v474
        %504 = vmatmul.f32.gmra.mxu0 %v486
        %v505 = vpop.f32.mrf.mxu0
        %v506 = vadd.f32 0.0, %v505
        %507 = vdwg.mxu0
        %s508 = scalar_lea.vmem %s2, 8
        %v509 = vld [vmem:[%s508] sm:$0xff]
        %511 = vset.pattern.permute.xlu0 0
        %512 = vperm.xlu0 %511, %v509
        %v513 = vpop.permute.xlu0 %512
        %vm515 = vcmp.gt.f32.partialorder %v506, %v513
        %v516 = vsel %vm515, 1, 0
        %v517 = vcvt.s32.f32 %v516
        %v518 = vld [vmem:[%s5] sm:$0xff]
        %v519 = vld [vmem:[%s5 + $0x8] sm:$0xff]
        %v520 = vld [vmem:[%s5 + $0x10] sm:$0xff]
        %v521 = vld [vmem:[%s5 + $0x18] sm:$0xff]
        %v522 = vld [vmem:[%s5 + $0x20] sm:$0xff]
        %v523 = vld [vmem:[%s5 + $0x28] sm:$0xff]
        %v524 = vld [vmem:[%s5 + $0x30] sm:$0xff]
        %v525 = vld [vmem:[%s5 + $0x38] sm:$0xff]
        %v527 = vsel %vm251, %v517, 0
        %529 = vmatpush.msra.mxu0 0.0
        %530 = vmatpush.msra.mxu0 0.0
        %531 = vmatpush.msra.mxu0 0.0
        %532 = vmatpush.msra.mxu0 0.0
        %533 = vmatpush.msra.mxu0 0.0
        %534 = vmatpush.msra.mxu0 0.0
        %535 = vmatpush.msra.mxu0 0.0
        %536 = vmatpush.msra.mxu0 0.0
        %537 = vmatpush.msra.mxu0 %v525
        %538 = vmatpush.msra.mxu0 %v524
        %539 = vmatpush.msra.mxu0 %v523
        %540 = vmatpush.msra.mxu0 %v522
        %541 = vmatpush.msra.mxu0 %v521
        %542 = vmatpush.msra.mxu0 %v520
        %543 = vmatpush.msra.mxu0 %v519
        %544 = vmatpush.msra.mxu0 %v518
        %545 = vmatmul.f32.gmra.mxu0 %v527
        %v546 = vpop.f32.mrf.mxu0
        %v547 = vadd.f32 0.0, %v546
        %548 = vdwg.mxu0
        %v549 = vld [vmem:[%s3] sm:$0xff]
        %551 = vrot.lane.b32.xlu0 %v549, 120
        %v552 = vpop.permute.xlu0 %551
        %v553 = vsel %vm410, %v552, 0
        %555 = vmatpush.msra.mxu0 0.0
        %556 = vmatpush.msra.mxu0 0.0
        %557 = vmatpush.msra.mxu0 0.0
        %558 = vmatpush.msra.mxu0 0.0
        %559 = vmatpush.msra.mxu0 0.0
        %560 = vmatpush.msra.mxu0 0.0
        %561 = vmatpush.msra.mxu0 0.0
        %562 = vmatpush.msra.mxu0 0.0
        %563 = vmatpush.msra.mxu0 0.0
        %564 = vmatpush.msra.mxu0 0.0
        %565 = vmatpush.msra.mxu0 0.0
        %566 = vmatpush.msra.mxu0 0.0
        %567 = vmatpush.msra.mxu0 0.0
        %568 = vmatpush.msra.mxu0 0.0
        %569 = vmatpush.msra.mxu0 0.0
        %570 = vmatpush.msra.mxu0 %v547
        %571 = vmatmul.f32.gmra.mxu0 %v553
        %v572 = vpop.f32.mrf.mxu0
        %v573 = vadd.f32 0.0, %v572
        %574 = vdwg.mxu0
        %v576 = vsel %vm410, %v401, 0
        %578 = vmatpush.msra.mxu0 0.0
        %579 = vmatpush.msra.mxu0 0.0
        %580 = vmatpush.msra.mxu0 0.0
        %581 = vmatpush.msra.mxu0 0.0
        %582 = vmatpush.msra.mxu0 0.0
        %583 = vmatpush.msra.mxu0 0.0
        %584 = vmatpush.msra.mxu0 0.0
        %585 = vmatpush.msra.mxu0 0.0
        %586 = vmatpush.msra.mxu0 0.0
        %587 = vmatpush.msra.mxu0 0.0
        %588 = vmatpush.msra.mxu0 0.0
        %589 = vmatpush.msra.mxu0 0.0
        %590 = vmatpush.msra.mxu0 0.0
        %591 = vmatpush.msra.mxu0 0.0
        %592 = vmatpush.msra.mxu0 0.0
        %593 = vmatpush.msra.mxu0 %v399
        %594 = vmatmul.f32.gmra.mxu0 %v576
        %v595 = vpop.f32.mrf.mxu0
        %v596 = vadd.f32 %v573, %v595
        %597 = vdwg.mxu0
        %v598 = vld [vmem:[#allocation2] sm:$0xff]
        %v599 = vld [vmem:[#allocation2 + $0x8] sm:$0xff]
        %602 = vrot.lane.b32.xlu0 %v598, 16
        %v603 = vpop.permute.xlu0 %602
        %604 = vrot.lane.b32.xlu0 %v599, 16
        %v605 = vpop.permute.xlu0 %604
        %vm606 = vcmask 130048
        %v607 = vsel %vm606, %v603, %v605
        %609 = vst.msk [vmem:[#allocation3] sm:$0xff] %vm251, %v607
        %v610 = vld [vmem:[#allocation2] sm:$0xff]
        %v611 = vld [vmem:[#allocation2 + $0x8] sm:$0xff]
        %614 = vrot.lane.b32.xlu0 %v610, 12
        %v615 = vpop.permute.xlu0 %614
        %616 = vrot.lane.b32.xlu0 %v611, 12
        %v617 = vpop.permute.xlu0 %616
        %vm618 = vcmask 97280
        %v619 = vsel %vm618, %v615, %v617
        %621 = vst.msk [vmem:[#allocation3 + $0x8] sm:$0xff] %vm251, %v619
        %v622 = vld [vmem:[#allocation2] sm:$0xff]
        %v623 = vld [vmem:[#allocation2 + $0x8] sm:$0xff]
        %626 = vrot.lane.b32.xlu0 %v622, 8
        %v627 = vpop.permute.xlu0 %626
        %628 = vrot.lane.b32.xlu0 %v623, 8
        %v629 = vpop.permute.xlu0 %628
        %v630 = vsel %vm410, %v627, %v629
        %632 = vst.msk [vmem:[#allocation3 + $0x10] sm:$0xff] %vm251, %v630
        %v633 = vld [vmem:[#allocation2] sm:$0xff]
        %v634 = vld [vmem:[#allocation2 + $0x8] sm:$0xff]
        %637 = vrot.lane.b32.xlu0 %v633, 4
        %v638 = vpop.permute.xlu0 %637
        %639 = vrot.lane.b32.xlu0 %v634, 4
        %v640 = vpop.permute.xlu0 %639
        %v641 = vsel %vm261, %v638, %v640
        %643 = vst.msk [vmem:[#allocation3 + $0x18] sm:$0xff] %vm251, %v641
        %v644 = vld [vmem:[#allocation2 + $0x8] sm:$0xff]
        %645 = vst.msk [vmem:[#allocation3 + $0x20] sm:$0xff] %vm251, %v644
        %v646 = vld [vmem:[#allocation2 + $0x8] sm:$0xff]
        %648 = vrot.lane.b32.xlu0 %v646, 124
        %v649 = vpop.permute.xlu0 %648
        %651 = vst.msk [vmem:[#allocation3 + $0x28] sm:$0xff] %vm251, %v649
        %v652 = vld [vmem:[#allocation2 + $0x8] sm:$0xff]
        %654 = vrot.lane.b32.xlu0 %v652, 120
        %v655 = vpop.permute.xlu0 %654
        %657 = vst.msk [vmem:[#allocation3 + $0x30] sm:$0xff] %vm251, %v655
        %v658 = vld [vmem:[#allocation2 + $0x8] sm:$0xff]
        %660 = vrot.lane.b32.xlu0 %v658, 116
        %v661 = vpop.permute.xlu0 %660
        %663 = vst.msk [vmem:[#allocation3 + $0x38] sm:$0xff] %vm251, %v661
        %v664 = vld [vmem:[#allocation2 + $0x8] sm:$0xff]
        %666 = vrot.lane.b32.xlu0 %v664, 112
        %v667 = vpop.permute.xlu0 %666
        %669 = vst.msk [vmem:[#allocation3 + $0x40] sm:$0xff] %vm251, %v667
        %v670 = vld [vmem:[#allocation3] sm:$0xff]
        %v671 = vld [vmem:[#allocation3 + $0x8] sm:$0xff]
        %v672 = vld [vmem:[#allocation3 + $0x10] sm:$0xff]
        %v673 = vld [vmem:[#allocation3 + $0x18] sm:$0xff]
        %v674 = vld [vmem:[#allocation3 + $0x20] sm:$0xff]
        %v675 = vld [vmem:[#allocation3 + $0x28] sm:$0xff]
        %v676 = vld [vmem:[#allocation3 + $0x30] sm:$0xff]
        %v677 = vld [vmem:[#allocation3 + $0x38] sm:$0xff]
        %v678 = vld [vmem:[#allocation3 + $0x40] sm:$0xff]
        %s679 = scalar_lea.vmem %s1, 16
        %v680 = vld [vmem:[%s679] sm:$0xff]
        %v682 = vsel %vm337, %v680, 0
        %684 = vmatpush.msra.mxu0 0.0
        %685 = vmatpush.msra.mxu0 0.0
        %686 = vmatpush.msra.mxu0 0.0
        %687 = vmatpush.msra.mxu0 0.0
        %688 = vmatpush.msra.mxu0 0.0
        %689 = vmatpush.msra.mxu0 0.0
        %690 = vmatpush.msra.mxu0 0.0
        %691 = vmatpush.msra.mxu0 %v678
        %692 = vmatpush.msra.mxu0 %v677
        %693 = vmatpush.msra.mxu0 %v676
        %694 = vmatpush.msra.mxu0 %v675
        %695 = vmatpush.msra.mxu0 %v674
        %696 = vmatpush.msra.mxu0 %v673
        %697 = vmatpush.msra.mxu0 %v672
        %698 = vmatpush.msra.mxu0 %v671
        %699 = vmatpush.msra.mxu0 %v670
        %700 = vmatmul.f32.gmra.mxu0 %v682
        %v701 = vpop.f32.mrf.mxu0
        %v702 = vadd.f32 0.0, %v701
        %703 = vdwg.mxu0
        %s704 = scalar_lea.vmem %s2, 16
        %v705 = vld [vmem:[%s704] sm:$0xff]
        %707 = vset.pattern.permute.xlu0 0
        %708 = vperm.xlu0 %707, %v705
        %v709 = vpop.permute.xlu0 %708
        %vm711 = vcmp.gt.f32.partialorder %v702, %v709
        %v712 = vsel %vm711, 1, 0
        %v713 = vcvt.s32.f32 %v712
        %v714 = vld [vmem:[%s5] sm:$0xff]
        %v715 = vld [vmem:[%s5 + $0x8] sm:$0xff]
        %v716 = vld [vmem:[%s5 + $0x10] sm:$0xff]
        %v717 = vld [vmem:[%s5 + $0x18] sm:$0xff]
        %v718 = vld [vmem:[%s5 + $0x20] sm:$0xff]
        %v719 = vld [vmem:[%s5 + $0x28] sm:$0xff]
        %v720 = vld [vmem:[%s5 + $0x30] sm:$0xff]
        %v721 = vld [vmem:[%s5 + $0x38] sm:$0xff]
        %v723 = vsel %vm251, %v713, 0
        %725 = vmatpush.msra.mxu0 0.0
        %726 = vmatpush.msra.mxu0 0.0
        %727 = vmatpush.msra.mxu0 0.0
        %728 = vmatpush.msra.mxu0 0.0
        %729 = vmatpush.msra.mxu0 0.0
        %730 = vmatpush.msra.mxu0 0.0
        %731 = vmatpush.msra.mxu0 0.0
        %732 = vmatpush.msra.mxu0 0.0
        %733 = vmatpush.msra.mxu0 %v721
        %734 = vmatpush.msra.mxu0 %v720
        %735 = vmatpush.msra.mxu0 %v719
        %736 = vmatpush.msra.mxu0 %v718
        %737 = vmatpush.msra.mxu0 %v717
        %738 = vmatpush.msra.mxu0 %v716
        %739 = vmatpush.msra.mxu0 %v715
        %740 = vmatpush.msra.mxu0 %v714
        %741 = vmatmul.f32.gmra.mxu0 %v723
        %v742 = vpop.f32.mrf.mxu0
        %v743 = vadd.f32 0.0, %v742
        %744 = vdwg.mxu0
        %v745 = vld [vmem:[%s3] sm:$0xff]
        %747 = vrot.lane.b32.xlu0 %v745, 112
        %v748 = vpop.permute.xlu0 %747
        %v749 = vsel %vm410, %v748, 0
        %751 = vmatpush.msra.mxu0 0.0
        %752 = vmatpush.msra.mxu0 0.0
        %753 = vmatpush.msra.mxu0 0.0
        %754 = vmatpush.msra.mxu0 0.0
        %755 = vmatpush.msra.mxu0 0.0
        %756 = vmatpush.msra.mxu0 0.0
        %757 = vmatpush.msra.mxu0 0.0
        %758 = vmatpush.msra.mxu0 0.0
        %759 = vmatpush.msra.mxu0 0.0
        %760 = vmatpush.msra.mxu0 0.0
        %761 = vmatpush.msra.mxu0 0.0
        %762 = vmatpush.msra.mxu0 0.0
        %763 = vmatpush.msra.mxu0 0.0
        %764 = vmatpush.msra.mxu0 0.0
        %765 = vmatpush.msra.mxu0 0.0
        %766 = vmatpush.msra.mxu0 %v743
        %767 = vmatmul.f32.gmra.mxu0 %v749
        %v768 = vpop.f32.mrf.mxu0
        %v769 = vadd.f32 0.0, %v768
        %770 = vdwg.mxu0
        %v771 = vadd.f32 %v596, %v769
        %772 = vxpose.xlu0.b32.start [1/16] %v771, 128
        %773 = vxpose.xlu0.b32.cont [2/16] 0.0, 128
        %774 = vxpose.xlu0.b32.cont [3/16] 0.0, 128
        %775 = vxpose.xlu0.b32.cont [4/16] 0.0, 128
        %776 = vxpose.xlu0.b32.cont [5/16] 0.0, 128
        %777 = vxpose.xlu0.b32.cont [6/16] 0.0, 128
        %778 = vxpose.xlu0.b32.cont [7/16] 0.0, 128
        %779 = vxpose.xlu0.b32.cont [8/16] 0.0, 128
        %780 = vxpose.xlu0.b32.cont [9/16] 0.0, 128
        %781 = vxpose.xlu0.b32.cont [10/16] 0.0, 128
        %782 = vxpose.xlu0.b32.cont [11/16] 0.0, 128
        %783 = vxpose.xlu0.b32.cont [12/16] 0.0, 128
        %784 = vxpose.xlu0.b32.cont [13/16] 0.0, 128
        %785 = vxpose.xlu0.b32.cont [14/16] 0.0, 128
        %786 = vxpose.xlu0.b32.cont [15/16] 0.0, 128
        %787 = vxpose.xlu0.b32.end [16/16] 0.0, 128
        %v788 = vpop.trf.xlu0
        %v789 = vpop.trf.xlu0
        %v790 = vpop.trf.xlu0
        %v791 = vpop.trf.xlu0
        %v792 = vpop.trf.xlu0
        %v793 = vpop.trf.xlu0
        %v794 = vpop.trf.xlu0
        %v795 = vpop.trf.xlu0
        %v796 = vpop.trf.xlu0
        %v797 = vpop.trf.xlu0
        %v798 = vpop.trf.xlu0
        %v799 = vpop.trf.xlu0
        %v800 = vpop.trf.xlu0
        %v801 = vpop.trf.xlu0
        %v802 = vpop.trf.xlu0
        %v803 = vpop.trf.xlu0
        %v804 = vld [vmem:[%s4] sm:$0x1]
        %v805 = vadd.f32 %v788, %v804
        %vm806 = vcmask 57344
        %807 = vst.msk [vmem:[%s241] sm:$0x1] %vm806, %v805
        %s808 = sand.u32 %s159, 1
        %s809 = scalar_lea.sflag [#allocation5], %s808
        %s810 = sand.u32 %s159, 1
        %s811 = scalar_lea.vmem [#allocation4], %s810
        // Predicated region
        $region45: #{rocket_forward.1} parent=43 // pred_check
          %p812 = pneg %p169
        $region46: #{rocket_forward.1} parent=43 // pred_check_branch
          %814 = sbr.rel (%p812) target = $region48
        $region47: #{rocket_forward.1} parent=43 // pred_region
          %816 = vsyncadd %s809, 0
          %s817 = scalar_lea.hbm %s6, %s20
          %s819 = sshll.u32 %s811, 4
          %s820 = int_to_ptr.vmem [resolvable:$true] %s819
          %s821 = sshll.u32 %s817, 4
          %s822 = int_to_ptr.hbm [resolvable:$true] %s821
          %824 = dma.vmem_to_hbm [thread:$0]  %s820, 16, %s822, %s809
        $region48: #{rocket_forward.1} parent=43 // pred_fallthru
          _
      $region44: #{rocket_forward.1} parent=5 // pred_fallthru
        _
      %p825 = scmp.le.s32.totalorder 2, %s15
      // Predicated region
      $region49: #{rocket_forward.1} parent=5 // pred_check
        %p826 = pneg %p825
      $region50: #{rocket_forward.1} parent=5 // pred_check_branch
        %828 = sbr.rel (%p826) target = $region52
      $region51: #{rocket_forward.1} parent=5 // pred_region
        %s829 = ssub.s32 %s15, 2
        // Predicated region
        $region53: #{rocket_forward.1} parent=51 // pred_check
          %p830 = pneg %p175
        $region54: #{rocket_forward.1} parent=51 // pred_check_branch
          %832 = sbr.rel (%p830) target = $region56
        $region55: #{rocket_forward.1} parent=51 // pred_region
          %s833 = sand.u32 %s160, 1
          %s834 = scalar_lea.sflag [#allocation5], %s833
          %s835 = sand.u32 %s160, 1
          %s836 = scalar_lea.vmem [#allocation4], %s835
          %838 = dma.done %s834, 16
        $region56: #{rocket_forward.1} parent=51 // pred_fallthru
          _
      $region52: #{rocket_forward.1} parent=5 // pred_fallthru
        _
    $region6: #{rocket_forward.1} parent=1 // loop_footer
      %s19 = sadd.s32 1, %s15
    $region7: #{rocket_forward.1} parent=1 // loop_footer_branch
      %14 = sbr.rel target = $region3
    $region8: #{rocket_forward.1} parent=1 // loop_exit
      _
    %839 = vsyncpa [#allocation5], 1
    %s840 = scalar_lea.sflag [#allocation5], 1
    %841 = vsyncpa %s840, 1

</llo_original>
